<compile_context>
chip_gen: v6e
topology: v6e:2x2x1
jax: 0.10.0
libtpu: 0.0.40
codegen_flags: <defaults>
</compile_context>

<pallas_src>
import functools

import jax
import jax.numpy as jnp
from jax.experimental import pallas as pl
from jax.experimental.pallas import tpu as pltpu


# -----------------------------------------------------------------------------
# helpers
# -----------------------------------------------------------------------------
def _pick_tile(n, target):
    """Largest multiple of 128 that divides n and is <= target, else n (full dim)."""
    if n <= target:
        return n
    t = (target // 128) * 128
    while t >= 128:
        if n % t == 0:
            return t
        t -= 128
    return n


# -----------------------------------------------------------------------------
# Pallas kernels
# -----------------------------------------------------------------------------
def _knn_kernel(xt_ref, x_ref, o_ref, *, k):
    """Fused pairwise distance (torch knn formula) + iterative top-k over lanes.
    Emits only the (T, k) int32 neighbor indices; no N^2 HBM traffic."""
    xt = xt_ref[0]                                                      # (T, 8)
    xa = x_ref[0]                                                       # (8, N)
    inner = jnp.dot(xt, xa, preferred_element_type=jnp.float32)         # (T, N)
    sq_t = jnp.sum(xt * xt, axis=-1, keepdims=True)                     # (T, 1)
    sq_a = jnp.sum(xa * xa, axis=0, keepdims=True)                      # (1, N)
    dist = 2.0 * inner - sq_t - sq_a                                    # -||xi-xj||^2
    n = dist.shape[-1]
    iota = jax.lax.broadcasted_iota(jnp.int32, dist.shape, 1)
    cols = []
    for _ in range(k):                                                  # static unroll (k=8)
        mx = jnp.max(dist, axis=-1, keepdims=True)
        j = jnp.min(jnp.where(dist == mx, iota, n), axis=-1, keepdims=True)
        cols.append(j)
        dist = jnp.where(iota == j, -jnp.inf, dist)
    o_ref[0] = jnp.concatenate(cols, axis=-1)                           # (T, k) int32


def _scorenet_kernel(xyz_ref, w1_ref, s1_ref, b1_ref, w2_ref, b2_ref, o_ref, *,
                     n_nets, m, score_bias):
    """All four ScoreNets as one lane-dense path:
    (T,8)@(8,64)+BN+ReLU -> block-diag (64,32)+bias -> per-8-lane softmax (+bias)."""
    x = xyz_ref[0]                                                      # (T, 8)
    h = jnp.dot(x, w1_ref[...], preferred_element_type=jnp.float32)     # (T, 64)
    h = jnp.maximum(h * s1_ref[...] + b1_ref[...], 0.0)
    logits = jnp.dot(h, w2_ref[...], preferred_element_type=jnp.float32) + b2_ref[...]
    # per-group softmax: subtracting the ROW max is valid for every 8-lane group
    mx = jnp.max(logits, axis=-1, keepdims=True)
    e = jnp.exp(jnp.maximum(logits - mx, -60.0))                        # clamp: no 0/0
    nm = n_nets * m
    r = jax.lax.broadcasted_iota(jnp.int32, (nm, nm), 0) // m
    c = jax.lax.broadcasted_iota(jnp.int32, (nm, nm), 1) // m
    g_blk = (r == c).astype(jnp.float32)                                # block-diag ones
    gs = jnp.dot(e, g_blk, preferred_element_type=jnp.float32)          # group sums
    o_ref[0] = e * pl.reciprocal(gs, approx=True) + score_bias          # (T, 32)


def _paconv_layer_kernel(sc_ref, xn_ref, xc_ref, wp_ref, wc_ref,
                         scale_ref, bias_ref, o_ref, *, k, m, cin, cout):
    """One PAConv layer tile: feat_trans_dgcnn + assemble_dgcnn(sum) + BN(eval) + ReLU.

    out[i] = sum_m (sum_k s[i,k,m] * x[idx[i,k]]) @ (W1_m + W2_m)
           - sum_m (sum_k s[i,k,m]) * x[idx[i,0]] @ W1_m

    Scores contract the RAW neighbor features over k on the VPU (small (T,Cin) FMAs),
    then a single (T,Cin)@(Cin,Cout) bf16 MXU matmul per m-block — no k-duplicated
    transforms, no (T, m*Cout) intermediate.
    """
    T = xc_ref.shape[1]
    xc = xc_ref[0].astype(jnp.float32)                                  # (T, Cin)

    ssum = sc_ref[0, 0, :, :]                                           # (T, m) f32
    for kk in range(1, k):
        ssum = ssum + sc_ref[0, kk, :, :]

    acc = jnp.zeros((T, cout), jnp.float32)
    for mi in range(m):                                                 # static unroll (m=8)
        am = jnp.zeros((T, cin), jnp.float32)
        for kk in range(k):                                             # static unroll (k=8)
            am = am + sc_ref[0, kk, :, mi:mi + 1] * xn_ref[0, kk].astype(jnp.float32)
        acc = acc + jnp.dot(am.astype(jnp.bfloat16),
                            wp_ref[mi * cin:(mi + 1) * cin, :],
                            preferred_element_type=jnp.float32)
        cm = ssum[:, mi:mi + 1] * xc                                    # center term
        acc = acc - jnp.dot(cm.astype(jnp.bfloat16),
                            wc_ref[mi * cin:(mi + 1) * cin, :],
                            preferred_element_type=jnp.float32)

    y = acc * scale_ref[...] + bias_ref[...]                            # BN (eval)
    o_ref[0] = jnp.maximum(y, 0.0)                                      # ReLU


def _conv5_pool_kernel(p_ref, w_ref, s_ref, b_ref, o_ref, mx_sc, sm_sc, *, inv_n):
    """1x1 conv 512->1024 (bf16 MXU) + BN + ReLU, tiled over N with running max/sum,
    final step writes [max-pool ; avg-pool]."""
    t = pl.program_id(1)
    y = jnp.dot(p_ref[0].astype(jnp.bfloat16), w_ref[...],
                preferred_element_type=jnp.float32)                     # (Tn, 1024)
    y = jnp.maximum(y * s_ref[...] + b_ref[...], 0.0)
    tile_mx = jnp.max(y, axis=0, keepdims=True)
    tile_sm = jnp.sum(y, axis=0, keepdims=True)

    @pl.when(t == 0)
    def _():
        mx_sc[...] = tile_mx
        sm_sc[...] = tile_sm

    @pl.when(t > 0)
    def _():
        mx_sc[...] = jnp.maximum(mx_sc[...], tile_mx)
        sm_sc[...] = sm_sc[...] + tile_sm

    @pl.when(t == pl.num_programs(1) - 1)
    def _():
        o_ref[0] = jnp.concatenate([mx_sc[...], sm_sc[...] * inv_n], axis=-1)


def _head_kernel(f_ref, w1_ref, s1_ref, b1_ref, w2_ref, s2_ref, b2_ref,
                 w3_ref, b3_ref, o_ref):
    """linear1+BN+ReLU -> linear2+BN+ReLU -> linear3 (dropout == identity in eval).
    bf16 MXU operands, f32 accumulation / elementwise."""
    h = jnp.dot(f_ref[...].astype(jnp.bfloat16), w1_ref[...],
                preferred_element_type=jnp.float32)
    h = jnp.maximum(h * s1_ref[...] + b1_ref[...], 0.0)
    h = jnp.dot(h.astype(jnp.bfloat16), w2_ref[...],
                preferred_element_type=jnp.float32)
    h = jnp.maximum(h * s2_ref[...] + b2_ref[...], 0.0)
    o_ref[...] = jnp.dot(h.astype(jnp.bfloat16), w3_ref[...],
                         preferred_element_type=jnp.float32) + b3_ref[...]


# -----------------------------------------------------------------------------
# Pallas wrappers
# -----------------------------------------------------------------------------
def knn_pallas(x, k):
    """x: (B, 3, N) -> idx (B, N, k) int32 of k nearest neighbors."""
    B, C, N = x.shape
    Cp = 8
    xp = jnp.pad(x, ((0, 0), (0, Cp - C), (0, 0)))                      # (B, 8, N)
    xt = xp.transpose(0, 2, 1)                                          # (B, N, 8)
    T = _pick_tile(N, 128)
    kern = functools.partial(_knn_kernel, k=k)
    return pl.pallas_call(
        kern,
        out_shape=jax.ShapeDtypeStruct((B, N, k), jnp.int32),
        grid=(B, N // T),
        in_specs=[pl.BlockSpec((1, T, Cp), lambda b, i: (b, i, 0)),
                  pl.BlockSpec((1, Cp, N), lambda b, i: (b, 0, 0))],
        out_specs=pl.BlockSpec((1, T, k), lambda b, i: (b, i, 0)),
        compiler_params=pltpu.CompilerParams(
            dimension_semantics=("parallel", "parallel"),
            vmem_limit_bytes=32 * 1024 * 1024),
    )(xt, xp)


def scorenet_fused_pallas(xyz_flat, sn_params, *, n_nets, m, score_bias=0.5):
    """xyz_flat: (B, k*N, 8) -> scores for ALL four layers, (B, k*N, 4*m)."""
    w1, s1, b1, w2, b2 = sn_params
    B, NK, C = xyz_flat.shape
    H = w1.shape[1]
    O = w2.shape[1]
    T = _pick_tile(NK, 512)
    kern = functools.partial(_scorenet_kernel, n_nets=n_nets, m=m, score_bias=score_bias)
    return pl.pallas_call(
        kern,
        out_shape=jax.ShapeDtypeStruct((B, NK, O), jnp.float32),
        grid=(B, NK // T),
        in_specs=[pl.BlockSpec((1, T, C), lambda b, t: (b, t, 0)),
                  pl.BlockSpec((C, H), lambda b, t: (0, 0)),
                  pl.BlockSpec((1, H), lambda b, t: (0, 0)),
                  pl.BlockSpec((1, H), lambda b, t: (0, 0)),
                  pl.BlockSpec((H, O), lambda b, t: (0, 0)),
                  pl.BlockSpec((1, O), lambda b, t: (0, 0))],
        out_specs=pl.BlockSpec((1, T, O), lambda b, t: (b, t, 0)),
        compiler_params=pltpu.CompilerParams(
            dimension_semantics=("parallel", "parallel")),
    )(xyz_flat, w1, s1, b1, w2, b2)


def paconv_layer_pallas(sc, xn, xc, wp, wc, bn_scale, bn_bias, *, tile_target=256):
    """sc: (B,k,N,m) f32 scores, xn: (B,k,N,Cin) bf16 neighbor feats,
    xc: (B,N,Cin) bf16 center feats, wp/wc: (m*Cin, Cout) bf16 -> (B, N, Cout) f32."""
    B, k, N, m = sc.shape
    cin = xn.shape[-1]
    cout = wp.shape[-1]
    T = _pick_tile(N, tile_target)
    kern = functools.partial(_paconv_layer_kernel, k=k, m=m, cin=cin, cout=cout)
    return pl.pallas_call(
        kern,
        out_shape=jax.ShapeDtypeStruct((B, N, cout), jnp.float32),
        grid=(B, N // T),
        in_specs=[pl.BlockSpec((1, k, T, m), lambda b, i: (b, 0, i, 0)),
                  pl.BlockSpec((1, k, T, cin), lambda b, i: (b, 0, i, 0)),
                  pl.BlockSpec((1, T, cin), lambda b, i: (b, i, 0)),
                  pl.BlockSpec((m * cin, cout), lambda b, i: (0, 0)),
                  pl.BlockSpec((m * cin, cout), lambda b, i: (0, 0)),
                  pl.BlockSpec((1, cout), lambda b, i: (0, 0)),
                  pl.BlockSpec((1, cout), lambda b, i: (0, 0))],
        out_specs=pl.BlockSpec((1, T, cout), lambda b, i: (b, i, 0)),
        compiler_params=pltpu.CompilerParams(
            dimension_semantics=("parallel", "parallel"),
            vmem_limit_bytes=32 * 1024 * 1024),
    )(sc, xn, xc, wp, wc, bn_scale.reshape(1, cout), bn_bias.reshape(1, cout))


def conv5_pool_pallas(point, w, scale, bias):
    """point: (B, N, 512) -> (B, 2048) = [maxpool(relu(bn(conv))); avgpool(...)]."""
    B, N, Cin = point.shape
    Co = w.shape[1]
    Tn = _pick_tile(N, 256)
    kern = functools.partial(_conv5_pool_kernel, inv_n=1.0 / N)
    out = pl.pallas_call(
        kern,
        out_shape=jax.ShapeDtypeStruct((B, 1, 2 * Co), jnp.float32),
        grid=(B, N // Tn),
        in_specs=[pl.BlockSpec((1, Tn, Cin), lambda b, t: (b, t, 0)),
                  pl.BlockSpec((Cin, Co), lambda b, t: (0, 0)),
                  pl.BlockSpec((1, Co), lambda b, t: (0, 0)),
                  pl.BlockSpec((1, Co), lambda b, t: (0, 0))],
        out_specs=pl.BlockSpec((1, 1, 2 * Co), lambda b, t: (b, 0, 0)),
        scratch_shapes=[pltpu.VMEM((1, Co), jnp.float32),
                        pltpu.VMEM((1, Co), jnp.float32)],
        compiler_params=pltpu.CompilerParams(
            dimension_semantics=("parallel", "arbitrary"),
            vmem_limit_bytes=32 * 1024 * 1024),
    )(point, w, scale.reshape(1, Co), bias.reshape(1, Co))
    return out.reshape(B, 2 * Co)


def head_pallas(feat, p):
    """feat: (B, 2048) -> logits (B, output_channels)."""
    B, F = feat.shape
    H1 = p['lin1_w'].shape[1]
    H2 = p['lin2_w'].shape[1]
    O = p['lin3_w'].shape[1]
    return pl.pallas_call(
        _head_kernel,
        out_shape=jax.ShapeDtypeStruct((B, O), jnp.float32),
        grid=(1,),
        in_specs=[pl.BlockSpec((B, F), lambda i: (0, 0)),
                  pl.BlockSpec((F, H1), lambda i: (0, 0)),
                  pl.BlockSpec((1, H1), lambda i: (0, 0)),
                  pl.BlockSpec((1, H1), lambda i: (0, 0)),
                  pl.BlockSpec((H1, H2), lambda i: (0, 0)),
                  pl.BlockSpec((1, H2), lambda i: (0, 0)),
                  pl.BlockSpec((1, H2), lambda i: (0, 0)),
                  pl.BlockSpec((H2, O), lambda i: (0, 0)),
                  pl.BlockSpec((1, O), lambda i: (0, 0))],
        out_specs=pl.BlockSpec((B, O), lambda i: (0, 0)),
    )(feat, p['lin1_w'], p['bn11_scale'].reshape(1, H1), p['bn11_bias'].reshape(1, H1),
      p['lin2_w'], p['bn22_scale'].reshape(1, H2), p['bn22_bias'].reshape(1, H2),
      p['lin3_w'], p['lin3_b'].reshape(1, O))


# -----------------------------------------------------------------------------
# Parameters (deterministic synthetic init, shapes/layout from the PyTorch __init__)
# -----------------------------------------------------------------------------
def make_params(key, k=8, m=8, output_channels=20):
    dims = [(3, 64), (64, 64), (64, 128), (128, 256)]
    n_nets = len(dims)
    H = 16
    keys = iter(jax.random.split(key, 64))
    nk = lambda: next(keys)

    def bn_eval(c):  # torch defaults: gamma=1, beta=0, running_mean=0, running_var=1
        scale = jnp.ones((c,), jnp.float32) / jnp.sqrt(1.0 + 1e-5)
        return scale, jnp.zeros((c,), jnp.float32)

    layers = []
    sn_w1, sn_s1, sn_b1, sn_w2, sn_b2 = [], [], [], [], []
    for cin, cout in dims:
        cin_p = max(8, cin)
        std = (2.0 / (2 * cin * cout)) ** 0.5                           # kaiming-normal-ish
        kmat = std * jax.random.normal(nk(), (2 * cin, m * cout), jnp.float32)
        w1 = kmat[:cin]
        w2 = kmat[cin:]
        wp_blocks, wc_blocks = [], []
        for mi in range(m):                                             # row-stacked banks
            b1 = w1[:, mi * cout:(mi + 1) * cout]
            b2 = w2[:, mi * cout:(mi + 1) * cout]
            wp_blocks.append(jnp.pad(b1 + b2, ((0, cin_p - cin), (0, 0))))  # W1_m + W2_m
            wc_blocks.append(jnp.pad(b1, ((0, cin_p - cin), (0, 0))))       # W1_m (center)
        wp = jnp.concatenate(wp_blocks, axis=0).astype(jnp.bfloat16)    # (m*cin_p, cout)
        wc = jnp.concatenate(wc_blocks, axis=0).astype(jnp.bfloat16)
        bn_scale, bn_bias = bn_eval(cout)
        layers.append(dict(wp=wp, wc=wc, cin_p=cin_p,
                           bn_scale=bn_scale, bn_bias=bn_bias))
        # ScoreNet(6 -> 16 -> m), hidden BN in eval mode; input padded 6 -> 8
        w1s = (2.0 / 6.0) ** 0.5 * jax.random.normal(nk(), (6, H), jnp.float32)
        sn_w1.append(jnp.pad(w1s, ((0, 2), (0, 0))))                    # (8, 16)
        s, b = bn_eval(H)
        sn_s1.append(s.reshape(1, H))
        sn_b1.append(b.reshape(1, H))
        sn_w2.append((1.0 / 16.0) ** 0.5 * jax.random.normal(nk(), (H, m), jnp.float32))
        sn_b2.append(0.1 * jax.random.normal(nk(), (1, m), jnp.float32))

    # fused ScoreNet parameters: concat first layer, block-diagonal second layer
    w1_all = jnp.concatenate(sn_w1, axis=1)                             # (8, 64)
    s1_all = jnp.concatenate(sn_s1, axis=1)                             # (1, 64)
    b1_all = jnp.concatenate(sn_b1, axis=1)                             # (1, 64)
    w2_bd = jnp.zeros((n_nets * H, n_nets * m), jnp.float32)
    for g in range(n_nets):
        w2_bd = w2_bd.at[g * H:(g + 1) * H, g * m:(g + 1) * m].set(sn_w2[g])
    b2_all = jnp.concatenate(sn_b2, axis=1)                             # (1, 32)
    scorenet = (w1_all, s1_all, b1_all, w2_bd, b2_all)

    conv5_w = ((1.0 / 512.0) ** 0.5
               * jax.random.normal(nk(), (512, 1024), jnp.float32)).astype(jnp.bfloat16)
    bn5_scale, bn5_bias = bn_eval(1024)
    lin1_w = ((1.0 / 2048.0) ** 0.5
              * jax.random.normal(nk(), (2048, 512), jnp.float32)).astype(jnp.bfloat16)
    bn11_scale, bn11_bias = bn_eval(512)
    lin2_w = ((1.0 / 512.0) ** 0.5
              * jax.random.normal(nk(), (512, 256), jnp.float32)).astype(jnp.bfloat16)
    bn22_scale, bn22_bias = bn_eval(256)
    lin3_w = ((1.0 / 256.0) ** 0.5
              * jax.random.normal(nk(), (256, output_channels), jnp.float32)).astype(jnp.bfloat16)
    lin3_b = 0.1 * jax.random.normal(nk(), (output_channels,), jnp.float32)

    return dict(k=k, m=m, n_nets=n_nets, layers=layers, scorenet=scorenet,
                conv5_w=conv5_w, bn5_scale=bn5_scale, bn5_bias=bn5_bias,
                lin1_w=lin1_w, bn11_scale=bn11_scale, bn11_bias=bn11_bias,
                lin2_w=lin2_w, bn22_scale=bn22_scale, bn22_bias=bn22_bias,
                lin3_w=lin3_w, lin3_b=lin3_b)


# -----------------------------------------------------------------------------
# Full PAConv forward
# -----------------------------------------------------------------------------
def paconv_forward(x, params):
    """x: (B, 3, N) float32 (same layout as the PyTorch module) -> logits (B, out_ch)."""
    B, C, N = x.shape
    k = params['k']
    m = params['m']
    n_nets = params['n_nets']

    idx = knn_pallas(x, k)                                              # (B, N, k) int32
    idxT = idx.transpose(0, 2, 1)                                       # (B, k, N)
    idx0 = idxT[:, 0, :]                                                # (B, N) "center" rows
    xT = x.transpose(0, 2, 1)                                           # (B, N, 3)

    # k-major ScoreNet input, channel-padded 6 -> 8: [neighbor - center, neighbor, 0, 0]
    neighbor = jax.vmap(lambda f, ii: f[ii])(xT, idxT)                  # (B, k, N, 3)
    center = xT[:, None, :, :]
    xyz = jnp.concatenate([neighbor - center, neighbor,
                           jnp.zeros((B, k, N, 2), x.dtype)], axis=-1)  # (B, k, N, 8)

    # one fused ScoreNet pass for all four layers, already k-major: (B, k, N, 4*m)
    scores_all = scorenet_fused_pallas(xyz.reshape(B, k * N, 8), params['scorenet'],
                                       n_nets=n_nets, m=m, score_bias=0.5)
    scores_all = scores_all.reshape(B, k, N, n_nets * m)

    # layer-1 features: xyz padded to 8 channels (weight rows for pad channels are zero)
    cur = jnp.pad(xT, ((0, 0), (0, 0), (0, 5)))                         # (B, N, 8) f32
    feats = []
    for g, lp in enumerate(params['layers']):
        sc = scores_all[:, :, :, g * m:(g + 1) * m]                     # (B, k, N, m) f32
        cur_b = cur.astype(jnp.bfloat16)                                # halve gather traffic
        xn = jax.vmap(lambda f, ii: f[ii])(cur_b, idxT)                 # (B, k, N, Cin) bf16
        xc = jax.vmap(lambda f, ii: f[ii])(cur_b, idx0)                 # (B, N, Cin)    bf16
        cur = paconv_layer_pallas(sc, xn, xc, lp['wp'], lp['wc'],
                                  lp['bn_scale'], lp['bn_bias'])        # (B, N, Cout) f32
        feats.append(cur)

    point = jnp.concatenate(feats, axis=-1)                             # (B, N, 512)
    pooled = conv5_pool_pallas(point, params['conv5_w'],
                               params['bn5_scale'], params['bn5_bias']) # (B, 2048)
    logits = head_pallas(pooled, params)                                # (B, out_ch)
    return logits


if __name__ == "__main__":
    key = jax.random.PRNGKey(0)
    kx, kp = jax.random.split(key)

    B, C, N = 2, 3, 64          # small point cloud: 2 clouds, 64 points, xyz coords
    K_NEIGHBORS = 8
    x = jax.random.normal(kx, (B, C, N), jnp.float32)

    params = make_params(kp, k=K_NEIGHBORS, m=8, output_channels=20)

    logits = paconv_forward(x, params)
    jax.block_until_ready(logits)
    assert logits.shape == (B, 20) and logits.dtype == jnp.float32
    assert bool(jnp.all(jnp.isfinite(logits)))
    print("KERNEL_OK")
</pallas_src>

<mosaic_0001>
module attributes {stable_mosaic.version = 11 : i64} {
  func.func @_knn_kernel(%arg0: i32, %arg1: i32, %arg2: memref<1x64x8xf32, #tpu.memory_space<vmem>>, %arg3: memref<1x8x64xf32, #tpu.memory_space<vmem>>, %arg4: memref<1x64x8xi32, #tpu.memory_space<vmem>>) attributes {dimension_semantics = [#tpu.dimension_semantics<parallel>, #tpu.dimension_semantics<parallel>], iteration_bounds = array<i64: 2, 1>, scalar_prefetch = 0 : i64, scratch_operands = 0 : i64, tpu.core_type = #tpu.core_type<tc>, window_params = [{transform_indices = @transform_0, window_bounds = array<i64: 1, 64, 8>}, {transform_indices = @transform_1, window_bounds = array<i64: 1, 8, 64>}, {transform_indices = @transform_2, window_bounds = array<i64: 1, 64, 8>}]} {
    %c0 = arith.constant 0 : index
    %c0_0 = arith.constant 0 : index
    %c0_1 = arith.constant 0 : index
    %0 = vector.load %arg2[%c0, %c0_0, %c0_1] : memref<1x64x8xf32, #tpu.memory_space<vmem>>, vector<1x64x8xf32>
    %1 = vector.shape_cast %0 : vector<1x64x8xf32> to vector<64x8xf32>
    %c0_2 = arith.constant 0 : index
    %c0_3 = arith.constant 0 : index
    %c0_4 = arith.constant 0 : index
    %2 = vector.load %arg3[%c0_2, %c0_3, %c0_4] : memref<1x8x64xf32, #tpu.memory_space<vmem>>, vector<1x8x64xf32>
    %3 = vector.shape_cast %2 : vector<1x8x64xf32> to vector<8x64xf32>
    %cst = arith.constant dense<0.000000e+00> : vector<64x64xf32>
    %4 = tpu.matmul %1, %3, %cst {dimension_numbers = #tpu.dot_dimension_numbers<[1], [0], [0], [1], [0, 0, 1, 1], [], []>} : vector<64x8xf32>, vector<8x64xf32>, vector<64x64xf32> -> vector<64x64xf32>
    %5 = arith.mulf %1, %1 : vector<64x8xf32>
    %cst_5 = arith.constant dense<0.000000e+00> : vector<64xf32>
    %6 = vector.multi_reduction <add>, %5, %cst_5 [1] : vector<64x8xf32> to vector<64xf32>
    %7 = vector.shape_cast %6 : vector<64xf32> to vector<64x1xf32>
    %8 = arith.mulf %3, %3 : vector<8x64xf32>
    %cst_6 = arith.constant dense<0.000000e+00> : vector<64xf32>
    %9 = vector.multi_reduction <add>, %8, %cst_6 [0] : vector<8x64xf32> to vector<64xf32>
    %10 = vector.shape_cast %9 : vector<64xf32> to vector<1x64xf32>
    %cst_7 = arith.constant 2.000000e+00 : f32
    %11 = vector.broadcast %cst_7 : f32 to vector<64x64xf32>
    %12 = arith.mulf %11, %4 : vector<64x64xf32>
    %13 = vector.broadcast %7 : vector<64x1xf32> to vector<64x64xf32>
    %14 = arith.subf %12, %13 : vector<64x64xf32>
    %15 = vector.broadcast %10 : vector<1x64xf32> to vector<64x64xf32>
    %16 = arith.subf %14, %15 : vector<64x64xf32>
    %17 = tpu.iota {dimensions = array<i32: 1>} : vector<64x64xi32>
    %cst_8 = arith.constant dense<0xFF800000> : vector<64xf32>
    %18 = vector.multi_reduction <maximumf>, %16, %cst_8 [1] : vector<64x64xf32> to vector<64xf32>
    %19 = vector.shape_cast %18 : vector<64xf32> to vector<64x1xf32>
    %20 = vector.broadcast %19 : vector<64x1xf32> to vector<64x64xf32>
    %21 = arith.cmpf oeq, %16, %20 : vector<64x64xf32>
    %c64_i32 = arith.constant 64 : i32
    %22 = vector.broadcast %c64_i32 : i32 to vector<64x64xi32>
    %23 = arith.select %21, %17, %22 : vector<64x64xi1>, vector<64x64xi32>
    %cst_9 = arith.constant dense<2147483647> : vector<64xi32>
    %24 = vector.multi_reduction <minsi>, %23, %cst_9 [1] : vector<64x64xi32> to vector<64xi32>
    %25 = vector.shape_cast %24 : vector<64xi32> to vector<64x1xi32>
    %26 = vector.broadcast %25 : vector<64x1xi32> to vector<64x64xi32>
    %27 = arith.cmpi eq, %17, %26 : vector<64x64xi32>
    %cst_10 = arith.constant 0xFF800000 : f32
    %28 = vector.broadcast %cst_10 : f32 to vector<64x64xf32>
    %29 = arith.select %27, %28, %16 : vector<64x64xi1>, vector<64x64xf32>
    %cst_11 = arith.constant dense<0xFF800000> : vector<64xf32>
    %30 = vector.multi_reduction <maximumf>, %29, %cst_11 [1] : vector<64x64xf32> to vector<64xf32>
    %31 = vector.shape_cast %30 : vector<64xf32> to vector<64x1xf32>
    %32 = vector.broadcast %31 : vector<64x1xf32> to vector<64x64xf32>
    %33 = arith.cmpf oeq, %29, %32 : vector<64x64xf32>
    %c64_i32_12 = arith.constant 64 : i32
    %34 = vector.broadcast %c64_i32_12 : i32 to vector<64x64xi32>
    %35 = arith.select %33, %17, %34 : vector<64x64xi1>, vector<64x64xi32>
    %cst_13 = arith.constant dense<2147483647> : vector<64xi32>
    %36 = vector.multi_reduction <minsi>, %35, %cst_13 [1] : vector<64x64xi32> to vector<64xi32>
    %37 = vector.shape_cast %36 : vector<64xi32> to vector<64x1xi32>
    %38 = vector.broadcast %37 : vector<64x1xi32> to vector<64x64xi32>
    %39 = arith.cmpi eq, %17, %38 : vector<64x64xi32>
    %cst_14 = arith.constant 0xFF800000 : f32
    %40 = vector.broadcast %cst_14 : f32 to vector<64x64xf32>
    %41 = arith.select %39, %40, %29 : vector<64x64xi1>, vector<64x64xf32>
    %cst_15 = arith.constant dense<0xFF800000> : vector<64xf32>
    %42 = vector.multi_reduction <maximumf>, %41, %cst_15 [1] : vector<64x64xf32> to vector<64xf32>
    %43 = vector.shape_cast %42 : vector<64xf32> to vector<64x1xf32>
    %44 = vector.broadcast %43 : vector<64x1xf32> to vector<64x64xf32>
    %45 = arith.cmpf oeq, %41, %44 : vector<64x64xf32>
    %c64_i32_16 = arith.constant 64 : i32
    %46 = vector.broadcast %c64_i32_16 : i32 to vector<64x64xi32>
    %47 = arith.select %45, %17, %46 : vector<64x64xi1>, vector<64x64xi32>
    %cst_17 = arith.constant dense<2147483647> : vector<64xi32>
    %48 = vector.multi_reduction <minsi>, %47, %cst_17 [1] : vector<64x64xi32> to vector<64xi32>
    %49 = vector.shape_cast %48 : vector<64xi32> to vector<64x1xi32>
    %50 = vector.broadcast %49 : vector<64x1xi32> to vector<64x64xi32>
    %51 = arith.cmpi eq, %17, %50 : vector<64x64xi32>
    %cst_18 = arith.constant 0xFF800000 : f32
    %52 = vector.broadcast %cst_18 : f32 to vector<64x64xf32>
    %53 = arith.select %51, %52, %41 : vector<64x64xi1>, vector<64x64xf32>
    %cst_19 = arith.constant dense<0xFF800000> : vector<64xf32>
    %54 = vector.multi_reduction <maximumf>, %53, %cst_19 [1] : vector<64x64xf32> to vector<64xf32>
    %55 = vector.shape_cast %54 : vector<64xf32> to vector<64x1xf32>
    %56 = vector.broadcast %55 : vector<64x1xf32> to vector<64x64xf32>
    %57 = arith.cmpf oeq, %53, %56 : vector<64x64xf32>
    %c64_i32_20 = arith.constant 64 : i32
    %58 = vector.broadcast %c64_i32_20 : i32 to vector<64x64xi32>
    %59 = arith.select %57, %17, %58 : vector<64x64xi1>, vector<64x64xi32>
    %cst_21 = arith.constant dense<2147483647> : vector<64xi32>
    %60 = vector.multi_reduction <minsi>, %59, %cst_21 [1] : vector<64x64xi32> to vector<64xi32>
    %61 = vector.shape_cast %60 : vector<64xi32> to vector<64x1xi32>
    %62 = vector.broadcast %61 : vector<64x1xi32> to vector<64x64xi32>
    %63 = arith.cmpi eq, %17, %62 : vector<64x64xi32>
    %cst_22 = arith.constant 0xFF800000 : f32
    %64 = vector.broadcast %cst_22 : f32 to vector<64x64xf32>
    %65 = arith.select %63, %64, %53 : vector<64x64xi1>, vector<64x64xf32>
    %cst_23 = arith.constant dense<0xFF800000> : vector<64xf32>
    %66 = vector.multi_reduction <maximumf>, %65, %cst_23 [1] : vector<64x64xf32> to vector<64xf32>
    %67 = vector.shape_cast %66 : vector<64xf32> to vector<64x1xf32>
    %68 = vector.broadcast %67 : vector<64x1xf32> to vector<64x64xf32>
    %69 = arith.cmpf oeq, %65, %68 : vector<64x64xf32>
    %c64_i32_24 = arith.constant 64 : i32
    %70 = vector.broadcast %c64_i32_24 : i32 to vector<64x64xi32>
    %71 = arith.select %69, %17, %70 : vector<64x64xi1>, vector<64x64xi32>
    %cst_25 = arith.constant dense<2147483647> : vector<64xi32>
    %72 = vector.multi_reduction <minsi>, %71, %cst_25 [1] : vector<64x64xi32> to vector<64xi32>
    %73 = vector.shape_cast %72 : vector<64xi32> to vector<64x1xi32>
    %74 = vector.broadcast %73 : vector<64x1xi32> to vector<64x64xi32>
    %75 = arith.cmpi eq, %17, %74 : vector<64x64xi32>
    %cst_26 = arith.constant 0xFF800000 : f32
    %76 = vector.broadcast %cst_26 : f32 to vector<64x64xf32>
    %77 = arith.select %75, %76, %65 : vector<64x64xi1>, vector<64x64xf32>
    %cst_27 = arith.constant dense<0xFF800000> : vector<64xf32>
    %78 = vector.multi_reduction <maximumf>, %77, %cst_27 [1] : vector<64x64xf32> to vector<64xf32>
    %79 = vector.shape_cast %78 : vector<64xf32> to vector<64x1xf32>
    %80 = vector.broadcast %79 : vector<64x1xf32> to vector<64x64xf32>
    %81 = arith.cmpf oeq, %77, %80 : vector<64x64xf32>
    %c64_i32_28 = arith.constant 64 : i32
    %82 = vector.broadcast %c64_i32_28 : i32 to vector<64x64xi32>
    %83 = arith.select %81, %17, %82 : vector<64x64xi1>, vector<64x64xi32>
    %cst_29 = arith.constant dense<2147483647> : vector<64xi32>
    %84 = vector.multi_reduction <minsi>, %83, %cst_29 [1] : vector<64x64xi32> to vector<64xi32>
    %85 = vector.shape_cast %84 : vector<64xi32> to vector<64x1xi32>
    %86 = vector.broadcast %85 : vector<64x1xi32> to vector<64x64xi32>
    %87 = arith.cmpi eq, %17, %86 : vector<64x64xi32>
    %cst_30 = arith.constant 0xFF800000 : f32
    %88 = vector.broadcast %cst_30 : f32 to vector<64x64xf32>
    %89 = arith.select %87, %88, %77 : vector<64x64xi1>, vector<64x64xf32>
    %cst_31 = arith.constant dense<0xFF800000> : vector<64xf32>
    %90 = vector.multi_reduction <maximumf>, %89, %cst_31 [1] : vector<64x64xf32> to vector<64xf32>
    %91 = vector.shape_cast %90 : vector<64xf32> to vector<64x1xf32>
    %92 = vector.broadcast %91 : vector<64x1xf32> to vector<64x64xf32>
    %93 = arith.cmpf oeq, %89, %92 : vector<64x64xf32>
    %c64_i32_32 = arith.constant 64 : i32
    %94 = vector.broadcast %c64_i32_32 : i32 to vector<64x64xi32>
    %95 = arith.select %93, %17, %94 : vector<64x64xi1>, vector<64x64xi32>
    %cst_33 = arith.constant dense<2147483647> : vector<64xi32>
    %96 = vector.multi_reduction <minsi>, %95, %cst_33 [1] : vector<64x64xi32> to vector<64xi32>
    %97 = vector.shape_cast %96 : vector<64xi32> to vector<64x1xi32>
    %98 = vector.broadcast %97 : vector<64x1xi32> to vector<64x64xi32>
    %99 = arith.cmpi eq, %17, %98 : vector<64x64xi32>
    %cst_34 = arith.constant 0xFF800000 : f32
    %100 = vector.broadcast %cst_34 : f32 to vector<64x64xf32>
    %101 = arith.select %99, %100, %89 : vector<64x64xi1>, vector<64x64xf32>
    %cst_35 = arith.constant dense<0xFF800000> : vector<64xf32>
    %102 = vector.multi_reduction <maximumf>, %101, %cst_35 [1] : vector<64x64xf32> to vector<64xf32>
    %103 = vector.shape_cast %102 : vector<64xf32> to vector<64x1xf32>
    %104 = vector.broadcast %103 : vector<64x1xf32> to vector<64x64xf32>
    %105 = arith.cmpf oeq, %101, %104 : vector<64x64xf32>
    %c64_i32_36 = arith.constant 64 : i32
    %106 = vector.broadcast %c64_i32_36 : i32 to vector<64x64xi32>
    %107 = arith.select %105, %17, %106 : vector<64x64xi1>, vector<64x64xi32>
    %cst_37 = arith.constant dense<2147483647> : vector<64xi32>
    %108 = vector.multi_reduction <minsi>, %107, %cst_37 [1] : vector<64x64xi32> to vector<64xi32>
    %109 = vector.shape_cast %108 : vector<64xi32> to vector<64x1xi32>
    %110 = tpu.concatenate %25, %37, %49, %61, %73, %85, %97, %109 in 1 : vector<64x1xi32>, vector<64x1xi32>, vector<64x1xi32>, vector<64x1xi32>, vector<64x1xi32>, vector<64x1xi32>, vector<64x1xi32>, vector<64x1xi32> -> vector<64x8xi32>
    %c0_38 = arith.constant 0 : index
    %c0_39 = arith.constant 0 : index
    %c0_40 = arith.constant 0 : index
    %111 = vector.load %arg4[%c0_38, %c0_39, %c0_40] : memref<1x64x8xi32, #tpu.memory_space<vmem>>, vector<1x64x8xi32>
    %112 = vector.shape_cast %111 : vector<1x64x8xi32> to vector<64x8xi32>
    %113 = vector.shape_cast %110 : vector<64x8xi32> to vector<1x64x8xi32>
    tpu.vector_store %arg4[%c0_38, %c0_39, %c0_40], %113 {strides = array<i32>} : memref<1x64x8xi32, #tpu.memory_space<vmem>>, vector<1x64x8xi32>,
    return
  }
  func.func @transform_0(%arg0: i32, %arg1: i32) -> (i32, i32, i32) {
    %c0_i32 = arith.constant 0 : i32
    %c0_i32_0 = arith.constant 0 : i32
    return %arg0, %arg1, %c0_i32 : i32, i32, i32
  }
  func.func @transform_1(%arg0: i32, %arg1: i32) -> (i32, i32, i32) {
    %c0_i32 = arith.constant 0 : i32
    %c0_i32_0 = arith.constant 0 : i32
    %c0_i32_1 = arith.constant 0 : i32
    return %arg0, %c0_i32, %c0_i32_0 : i32, i32, i32
  }
  func.func @transform_2(%arg0: i32, %arg1: i32) -> (i32, i32, i32) {
    %c0_i32 = arith.constant 0 : i32
    %c0_i32_0 = arith.constant 0 : i32
    return %arg0, %arg1, %c0_i32 : i32, i32, i32
  }
}

</mosaic_0001>

<llo_original>
// kernel: tpu_custom_call.1
$region0: #{tpu_custom_call.1}
  #allocation0 [shape = 'u32[]', space=smem, size = 0x4, offset = 0x4, fixed_abs, tag = 'smem constant byte address 0x4 - core index']
  #allocation1 [shape = 'u32[144,128]{1,0:T(1,128)}', space=vmem, size = 0x12000, scoped, tag = 'internal scratch']
  %s0 = inlined_call_operand.vmem [shape: f32[2,64,8], index: 0, kind: input, shape index: {}]
  %s1 = inlined_call_operand.vmem [shape: f32[2,8,64], index: 1, kind: input, shape index: {}]
  %s2 = inlined_call_operand.vmem [shape: s32[2,64,8], index: 2, kind: output, shape index: {}]
  %s3 = sld [smem:[#allocation0]]
  $region41: #{tpu_custom_call.1} parent=0
    _
  %s5 = ssub.s32 1, %s3
  %s6 = scalar_select 0, %s5, %s3
  loop: start=0, step=1, limit=4
  $region2: #{tpu_custom_call.1} parent=0 // loop_pre_header
    _
  $region3: #{tpu_custom_call.1} parent=0 // loop_header
    %s8 = sphi 0, %s12
    %p9 = scmp.ge.s32.totalorder %s8, 4
    %s15 = sphi 0, %s27
    %s16 = sphi 0, %s23
    %s17 = sphi 0, %s15
    %s18 = sphi 0, %s16
    %s19 = sphi 0, %s17
    %s20 = sphi 0, %s18
    %s32 = sphi 0, %s34
    %s35 = sphi 0, %s32
    %s36 = sphi 0, %s35
    %s52 = sphi 0, %s36
    %s58 = sphi 0, %s60
    %s61 = sphi 0, %s58
    %s62 = sphi 0, %s61
    %s78 = sphi 0, %s62
    %s86 = sphi 0, %s88
    %s89 = sphi 0, %s86
    %s90 = sphi 0, %s89
    %s106 = sphi 0, %s90
  $region4: #{tpu_custom_call.1} parent=0 // loop_header_branch
    %11 = sbr.rel (%p9) target = $region8
  $region5: #{tpu_custom_call.1} parent=0 // loop_body
    %s13 = ssub.s32 %s8, 1
    %s14 = ssub.s32 %s8, 2
    %s21 = sadd.s32 1, %s16
    %p22 = scmp.ge.s32.totalorder %s21, 1
    %s23 = scalar_select %p22, 0, %s21
    %s24 = sadd.s32 1, %s15
    %s25 = scalar_select %p22, %s24, %s15
    %p26 = scmp.ge.s32.totalorder %s25, 2
    %s27 = scalar_select %p26, 0, %s25
    %s28 = ssub.s32 %s15, %s27
    %s29 = ssub.s32 %s16, %s23
    %s30 = sor.u32 %s28, %s29
    %p31 = scmp.eq.s32.totalorder %s30, 0
    %s33 = sadd.s32 %s32, 1
    %s34 = scalar_select %p31, %s32, %s33
    %p37 = pneg %p31
    %p38 = scmp.eq.s32.totalorder %s8, 1
    %p39 = por %p37, %p38
    %p40 = scmp.ne.s32.totalorder %s32, %s35
    %p41 = scmp.eq.s32.totalorder %s8, 0
    %p42 = por %p40, %p41
    %p43 = scmp.ne.s32.totalorder %s32, %s35
    %p44 = scmp.eq.s32.totalorder %s13, 1
    %p45 = por %p43, %p44
    %p46 = scmp.ne.s32.totalorder %s35, %s36
    %p47 = scmp.eq.s32.totalorder %s13, 0
    %p48 = por %p46, %p47
    %p49 = scmp.ne.s32.totalorder %s35, %s36
    %p50 = scmp.eq.s32.totalorder %s14, 1
    %p51 = por %p49, %p50
    %p53 = scmp.ne.s32.totalorder %s36, %s52
    %p54 = scmp.eq.s32.totalorder %s14, 0
    %p55 = por %p53, %p54
    %s56 = ssub.s32 %s15, %s27
    %p57 = scmp.eq.s32.totalorder %s56, 0
    %s59 = sadd.s32 %s58, 1
    %s60 = scalar_select %p57, %s58, %s59
    %p63 = pneg %p57
    %p64 = scmp.eq.s32.totalorder %s8, 1
    %p65 = por %p63, %p64
    %p66 = scmp.ne.s32.totalorder %s58, %s61
    %p67 = scmp.eq.s32.totalorder %s8, 0
    %p68 = por %p66, %p67
    %p69 = scmp.ne.s32.totalorder %s58, %s61
    %p70 = scmp.eq.s32.totalorder %s13, 1
    %p71 = por %p69, %p70
    %p72 = scmp.ne.s32.totalorder %s61, %s62
    %p73 = scmp.eq.s32.totalorder %s13, 0
    %p74 = por %p72, %p73
    %p75 = scmp.ne.s32.totalorder %s61, %s62
    %p76 = scmp.eq.s32.totalorder %s14, 1
    %p77 = por %p75, %p76
    %p79 = scmp.ne.s32.totalorder %s62, %s78
    %p80 = scmp.eq.s32.totalorder %s14, 0
    %p81 = por %p79, %p80
    %s82 = ssub.s32 %s15, %s27
    %s83 = ssub.s32 %s16, %s23
    %s84 = sor.u32 %s82, %s83
    %p85 = scmp.eq.s32.totalorder %s84, 0
    %s87 = sadd.s32 %s86, 1
    %s88 = scalar_select %p85, %s86, %s87
    %p91 = pneg %p85
    %p92 = scmp.eq.s32.totalorder %s8, 1
    %p93 = por %p91, %p92
    %p94 = scmp.ne.s32.totalorder %s86, %s89
    %p95 = scmp.eq.s32.totalorder %s8, 0
    %p96 = por %p94, %p95
    %p97 = scmp.ne.s32.totalorder %s86, %s89
    %p98 = scmp.eq.s32.totalorder %s13, 1
    %p99 = por %p97, %p98
    %p100 = scmp.ne.s32.totalorder %s89, %s90
    %p101 = scmp.eq.s32.totalorder %s13, 0
    %p102 = por %p100, %p101
    %p103 = scmp.ne.s32.totalorder %s89, %s90
    %p104 = scmp.eq.s32.totalorder %s14, 1
    %p105 = por %p103, %p104
    %p107 = scmp.ne.s32.totalorder %s90, %s106
    %p108 = scmp.eq.s32.totalorder %s14, 0
    %p109 = por %p107, %p108
    %p110 = scmp.le.s32.totalorder 1, %s8
    %p111 = scmp.lt.s32.totalorder %s8, 3
    %p112 = pnand %p110, %p111
    %p113 = pneg %p112
    // Predicated region
    $region9: #{tpu_custom_call.1} parent=5 // pred_check
      _
    $region10: #{tpu_custom_call.1} parent=5 // pred_check_branch
      %115 = sbr.rel (%p112) target = $region12
    $region11: #{tpu_custom_call.1} parent=5 // pred_region
      %s116 = ssub.s32 %s8, 1
    $region12: #{tpu_custom_call.1} parent=5 // pred_fallthru
      _
    %p117 = scmp.lt.s32.totalorder %s8, 2
    // Predicated region
    $region13: #{tpu_custom_call.1} parent=5 // pred_check
      %p118 = pneg %p117
    $region14: #{tpu_custom_call.1} parent=5 // pred_check_branch
      %120 = sbr.rel (%p118) target = $region16
    $region15: #{tpu_custom_call.1} parent=5 // pred_region
      // Predicated region
      $region17: #{tpu_custom_call.1} parent=15 // pred_check
        %p121 = pneg %p42
      $region18: #{tpu_custom_call.1} parent=15 // pred_check_branch
        %123 = sbr.rel (%p121) target = $region20
      $region19: #{tpu_custom_call.1} parent=15 // pred_region
        %s124 = smul.u32 8, %s16
        %p125 = scmp.lt.s32.totalorder %s15, 1
        %s126 = scalar_select %p125, %s15, 1
        %p127 = scmp.lt.s32.totalorder %s124, 7
        %s128 = scalar_select %p127, %s124, 7
        %s129 = smul.addr %s126, 8
        %s130 = sadd.s32 %s128, %s129
        %s131 = smul.addr %s130, 8
        %s132 = scalar_lea.vmem %s0, %s131
        %s133 = smul.u32 8, %s16
      $region20: #{tpu_custom_call.1} parent=15 // pred_fallthru
        _
      // Predicated region
      $region21: #{tpu_custom_call.1} parent=15 // pred_check
        %p134 = pneg %p68
      $region22: #{tpu_custom_call.1} parent=15 // pred_check_branch
        %136 = sbr.rel (%p134) target = $region24
      $region23: #{tpu_custom_call.1} parent=15 // pred_region
        %p137 = scmp.lt.s32.totalorder %s15, 1
        %s138 = scalar_select %p137, %s15, 1
        %s139 = smul.addr %s138, 8
        %s140 = scalar_lea.vmem %s1, %s139
      $region24: #{tpu_custom_call.1} parent=15 // pred_fallthru
        _
    $region16: #{tpu_custom_call.1} parent=5 // pred_fallthru
      _
    %p141 = scmp.le.s32.totalorder 1, %s8
    %p142 = scmp.lt.s32.totalorder %s8, 3
    %p143 = pnand %p141, %p142
    %p144 = pneg %p143
    // Predicated region
    $region25: #{tpu_custom_call.1} parent=5 // pred_check
      _
    $region26: #{tpu_custom_call.1} parent=5 // pred_check_branch
      %146 = sbr.rel (%p143) target = $region28
    $region27: #{tpu_custom_call.1} parent=5 // pred_region
      %s147 = ssub.s32 %s8, 1
      %s148 = smul.u32 8, %s18
      %p149 = scmp.lt.s32.totalorder %s17, 1
      %s150 = scalar_select %p149, %s17, 1
      %p151 = scmp.lt.s32.totalorder %s148, 7
      %s152 = scalar_select %p151, %s148, 7
      %s153 = smul.addr %s150, 8
      %s154 = sadd.s32 %s152, %s153
      %s155 = smul.addr %s154, 8
      %s156 = scalar_lea.vmem %s0, %s155
      %p157 = pneg %p48
      %p158 = pneg %p45
      %p159 = scmp.lt.s32.totalorder %s17, 1
      %s160 = scalar_select %p159, %s17, 1
      %s161 = smul.addr %s160, 8
      %s162 = scalar_lea.vmem %s1, %s161
      %p163 = pneg %p74
      %p164 = pneg %p71
      %p165 = pneg %p102
      %p166 = pneg %p99
      %s167 = smul.u32 8, %s18
      %p168 = scmp.lt.s32.totalorder %s17, 1
      %s169 = scalar_select %p168, %s17, 1
      %p170 = scmp.lt.s32.totalorder %s167, 7
      %s171 = scalar_select %p170, %s167, 7
      %s172 = smul.addr %s169, 8
      %s173 = sadd.s32 %s171, %s172
      %s174 = smul.addr %s173, 8
      %s175 = scalar_lea.vmem %s2, %s174
      %s176 = smul.u32 8, %s18
      %p177 = scmp.lt.s32.totalorder %s17, 1
      %s178 = scalar_select %p177, %s17, 1
      %p179 = scmp.lt.s32.totalorder %s176, 7
      %s180 = scalar_select %p179, %s176, 7
      %s181 = smul.addr %s178, 8
      %s182 = sadd.s32 %s180, %s181
      %s183 = smul.addr %s182, 8
      %s184 = scalar_lea.vmem %s0, %s183
      %s185 = smul.u32 8, %s18
      %p186 = scmp.lt.s32.totalorder %s17, 1
      %s187 = scalar_select %p186, %s17, 1
      %s188 = smul.addr %s187, 8
      %s189 = scalar_lea.vmem %s1, %s188
      %s190 = smul.u32 8, %s18
      %p191 = scmp.lt.s32.totalorder %s17, 1
      %s192 = scalar_select %p191, %s17, 1
      %p193 = scmp.lt.s32.totalorder %s190, 7
      %s194 = scalar_select %p193, %s190, 7
      %s195 = smul.addr %s192, 8
      %s196 = sadd.s32 %s194, %s195
      %s197 = smul.addr %s196, 8
      %s198 = scalar_lea.vmem %s2, %s197
      %s199 = smul.u32 8, %s18
      %v200 = vld [vmem:[%s184] sm:$0xff]
      %v201 = vld [vmem:[%s184 + $0x8] sm:$0xff]
      %v202 = vld [vmem:[%s184 + $0x10] sm:$0xff]
      %v203 = vld [vmem:[%s184 + $0x18] sm:$0xff]
      %v204 = vld [vmem:[%s184 + $0x20] sm:$0xff]
      %v205 = vld [vmem:[%s184 + $0x28] sm:$0xff]
      %v206 = vld [vmem:[%s184 + $0x30] sm:$0xff]
      %v207 = vld [vmem:[%s184 + $0x38] sm:$0xff]
      %v208 = vld [vmem:[%s189] sm:$0xff]
      %vm209 = vcmask 64512
      %v211 = vsel %vm209, %v200, 0
      %v214 = vsel %vm209, %v201, 0
      %v217 = vsel %vm209, %v202, 0
      %v220 = vsel %vm209, %v203, 0
      %v223 = vsel %vm209, %v204, 0
      %v226 = vsel %vm209, %v205, 0
      %v229 = vsel %vm209, %v206, 0
      %v232 = vsel %vm209, %v207, 0
      %234 = vmatprep.subr.mxu0 0.0
      %235 = vmatpush1.msra.mxu0 0.0
      %236 = vmatprep.subr.mxu0 0.0
      %237 = vmatpush1.msra.mxu0 0.0
      %238 = vmatprep.subr.mxu0 0.0
      %239 = vmatpush1.msra.mxu0 0.0
      %240 = vmatprep.subr.mxu0 0.0
      %241 = vmatpush1.msra.mxu0 0.0
      %242 = vmatprep.subr.mxu0 0.0
      %243 = vmatpush1.msra.mxu0 0.0
      %244 = vmatprep.subr.mxu0 0.0
      %245 = vmatpush1.msra.mxu0 0.0
      %246 = vmatprep.subr.mxu0 0.0
      %247 = vmatpush1.msra.mxu0 0.0
      %248 = vmatprep.subr.mxu0 0.0
      %249 = vmatpush1.msra.mxu0 0.0
      %250 = vmatprep.subr.mxu0 0.0
      %251 = vmatpush1.msra.mxu0 0.0
      %252 = vmatprep.subr.mxu0 0.0
      %253 = vmatpush1.msra.mxu0 0.0
      %254 = vmatprep.subr.mxu0 0.0
      %255 = vmatpush1.msra.mxu0 0.0
      %256 = vmatprep.subr.mxu0 0.0
      %257 = vmatpush1.msra.mxu0 0.0
      %258 = vmatprep.subr.mxu0 0.0
      %259 = vmatpush1.msra.mxu0 0.0
      %260 = vmatprep.subr.mxu0 0.0
      %261 = vmatpush1.msra.mxu0 0.0
      %262 = vmatprep.subr.mxu0 0.0
      %263 = vmatpush1.msra.mxu0 0.0
      %264 = vmatprep.subr.mxu0 0.0
      %265 = vmatpush1.msra.mxu0 %v208
      %266 = vmatprep.subr.mxu0 0.0
      %267 = vmatpush2.msra.mxu0 0.0
      %268 = vmatprep.subr.mxu0 0.0
      %269 = vmatpush2.msra.mxu0 0.0
      %270 = vmatprep.subr.mxu0 0.0
      %271 = vmatpush2.msra.mxu0 0.0
      %272 = vmatprep.subr.mxu0 0.0
      %273 = vmatpush2.msra.mxu0 0.0
      %274 = vmatprep.subr.mxu0 0.0
      %275 = vmatpush2.msra.mxu0 0.0
      %276 = vmatprep.subr.mxu0 0.0
      %277 = vmatpush2.msra.mxu0 0.0
      %278 = vmatprep.subr.mxu0 0.0
      %279 = vmatpush2.msra.mxu0 0.0
      %280 = vmatprep.subr.mxu0 0.0
      %281 = vmatpush2.msra.mxu0 0.0
      %282 = vmatprep.subr.mxu0 0.0
      %283 = vmatpush2.msra.mxu0 0.0
      %284 = vmatprep.subr.mxu0 0.0
      %285 = vmatpush2.msra.mxu0 0.0
      %286 = vmatprep.subr.mxu0 0.0
      %287 = vmatpush2.msra.mxu0 0.0
      %288 = vmatprep.subr.mxu0 0.0
      %289 = vmatpush2.msra.mxu0 0.0
      %290 = vmatprep.subr.mxu0 0.0
      %291 = vmatpush2.msra.mxu0 0.0
      %292 = vmatprep.subr.mxu0 0.0
      %293 = vmatpush2.msra.mxu0 0.0
      %294 = vmatprep.subr.mxu0 0.0
      %295 = vmatpush2.msra.mxu0 0.0
      %296 = vmatprep.subr.mxu0 0.0
      %297 = vmatpush2.msra.mxu0 0.0
      %298 = vmatprep.mubr.f32.mxu0 0.0
      %299 = vmatmul.mubr.f32.gmra.mxu0 %v211
      %v300 = vpop.f32.mrf.mxu0
      %v301 = vadd.f32 0.0, %v300
      %v302 = vpop.f32.mrf.mxu0
      %303 = vmatprep.mubr.f32.mxu0 0.0
      %304 = vmatmul.mubr.f32.gmra.mxu0 %v214
      %v305 = vpop.f32.mrf.mxu0
      %v306 = vadd.f32 0.0, %v305
      %v307 = vpop.f32.mrf.mxu0
      %308 = vmatprep.mubr.f32.mxu0 0.0
      %309 = vmatmul.mubr.f32.gmra.mxu0 %v217
      %v310 = vpop.f32.mrf.mxu0
      %v311 = vadd.f32 0.0, %v310
      %v312 = vpop.f32.mrf.mxu0
      %313 = vmatprep.mubr.f32.mxu0 0.0
      %314 = vmatmul.mubr.f32.gmra.mxu0 %v220
      %v315 = vpop.f32.mrf.mxu0
      %v316 = vadd.f32 0.0, %v315
      %v317 = vpop.f32.mrf.mxu0
      %318 = vmatprep.mubr.f32.mxu0 0.0
      %319 = vmatmul.mubr.f32.gmra.mxu0 %v223
      %v320 = vpop.f32.mrf.mxu0
      %v321 = vadd.f32 0.0, %v320
      %v322 = vpop.f32.mrf.mxu0
      %323 = vmatprep.mubr.f32.mxu0 0.0
      %324 = vmatmul.mubr.f32.gmra.mxu0 %v226
      %v325 = vpop.f32.mrf.mxu0
      %v326 = vadd.f32 0.0, %v325
      %v327 = vpop.f32.mrf.mxu0
      %328 = vmatprep.mubr.f32.mxu0 0.0
      %329 = vmatmul.mubr.f32.gmra.mxu0 %v229
      %v330 = vpop.f32.mrf.mxu0
      %v331 = vadd.f32 0.0, %v330
      %v332 = vpop.f32.mrf.mxu0
      %333 = vmatprep.mubr.f32.mxu0 0.0
      %334 = vmatmul.mubr.f32.gmra.mxu0 %v232
      %v335 = vpop.f32.mrf.mxu0
      %v336 = vadd.f32 0.0, %v335
      %v337 = vpop.f32.mrf.mxu0
      %338 = vdwg.mxu0
      %v339 = vmul.f32 %v200, %v200
      %v340 = vmul.f32 %v201, %v201
      %v341 = vmul.f32 %v202, %v202
      %v342 = vmul.f32 %v203, %v203
      %v343 = vmul.f32 %v204, %v204
      %v344 = vmul.f32 %v205, %v205
      %v345 = vmul.f32 %v206, %v206
      %v346 = vmul.f32 %v207, %v207
      %v347 = vsel %vm209, %v339, 0.0
      %348 = vadd.xlane.f32.xlu0 %v347
      %v349 = vpop.xlane.xlu0 %348
      %v350 = vsel %vm209, %v340, 0.0
      %351 = vadd.xlane.f32.xlu0 %v350
      %v352 = vpop.xlane.xlu0 %351
      %v353 = vsel %vm209, %v341, 0.0
      %354 = vadd.xlane.f32.xlu0 %v353
      %v355 = vpop.xlane.xlu0 %354
      %v356 = vsel %vm209, %v342, 0.0
      %357 = vadd.xlane.f32.xlu0 %v356
      %v358 = vpop.xlane.xlu0 %357
      %v359 = vsel %vm209, %v343, 0.0
      %360 = vadd.xlane.f32.xlu0 %v359
      %v361 = vpop.xlane.xlu0 %360
      %v362 = vsel %vm209, %v344, 0.0
      %363 = vadd.xlane.f32.xlu0 %v362
      %v364 = vpop.xlane.xlu0 %363
      %v365 = vsel %vm209, %v345, 0.0
      %366 = vadd.xlane.f32.xlu0 %v365
      %v367 = vpop.xlane.xlu0 %366
      %v368 = vsel %vm209, %v346, 0.0
      %369 = vadd.xlane.f32.xlu0 %v368
      %v370 = vpop.xlane.xlu0 %369
      %v371 = vmul.f32 %v208, %v208
      %vm372 = vcmask 523264
      %v373 = vsel %vm372, %v371, 0.0
      %v374 = vrot.slane %v373, 4
      %v375 = vadd.f32 %v373, %v374
      %v376 = vrot.slane %v375, 2
      %v377 = vadd.f32 %v375, %v376
      %v378 = vrot.slane %v377, 1
      %v379 = vadd.f32 %v377, %v378
      %v380 = vmul.f32 %v301, 2.0
      %v381 = vmul.f32 %v306, 2.0
      %v382 = vmul.f32 %v311, 2.0
      %v383 = vmul.f32 %v316, 2.0
      %v384 = vmul.f32 %v321, 2.0
      %v385 = vmul.f32 %v326, 2.0
      %v386 = vmul.f32 %v331, 2.0
      %v387 = vmul.f32 %v336, 2.0
      %v388 = vsub.f32 %v380, %v349
      %v389 = vsub.f32 %v381, %v352
      %v390 = vsub.f32 %v382, %v355
      %v391 = vsub.f32 %v383, %v358
      %v392 = vsub.f32 %v384, %v361
      %v393 = vsub.f32 %v385, %v364
      %v394 = vsub.f32 %v386, %v367
      %v395 = vsub.f32 %v387, %v370
      %v396 = vsub.f32 %v388, %v379
      %v397 = vsub.f32 %v389, %v379
      %v398 = vsub.f32 %v390, %v379
      %v399 = vsub.f32 %v391, %v379
      %v400 = vsub.f32 %v392, %v379
      %v401 = vsub.f32 %v393, %v379
      %v402 = vsub.f32 %v394, %v379
      %v403 = vsub.f32 %v395, %v379
      %v404 = vlaneseq
      %v405 = vand.u32 %v404, 127
      %v406 = vsel %vm372, %v396, -inf
      %407 = vmax.xlane.f32.xlu0 %v406
      %v408 = vpop.xlane.xlu0 %407
      %v409 = vsel %vm372, %v397, -inf
      %410 = vmax.xlane.f32.xlu0 %v409
      %v411 = vpop.xlane.xlu0 %410
      %v412 = vsel %vm372, %v398, -inf
      %413 = vmax.xlane.f32.xlu0 %v412
      %v414 = vpop.xlane.xlu0 %413
      %v415 = vsel %vm372, %v399, -inf
      %416 = vmax.xlane.f32.xlu0 %v415
      %v417 = vpop.xlane.xlu0 %416
      %v418 = vsel %vm372, %v400, -inf
      %419 = vmax.xlane.f32.xlu0 %v418
      %v420 = vpop.xlane.xlu0 %419
      %v421 = vsel %vm372, %v401, -inf
      %422 = vmax.xlane.f32.xlu0 %v421
      %v423 = vpop.xlane.xlu0 %422
      %v424 = vsel %vm372, %v402, -inf
      %425 = vmax.xlane.f32.xlu0 %v424
      %v426 = vpop.xlane.xlu0 %425
      %v427 = vsel %vm372, %v403, -inf
      %428 = vmax.xlane.f32.xlu0 %v427
      %v429 = vpop.xlane.xlu0 %428
      %vm430 = vcmp.eq.f32.partialorder %v396, %v408
      %vm431 = vcmp.eq.f32.partialorder %v397, %v411
      %vm432 = vcmp.eq.f32.partialorder %v398, %v414
      %vm433 = vcmp.eq.f32.partialorder %v399, %v417
      %vm434 = vcmp.eq.f32.partialorder %v400, %v420
      %vm435 = vcmp.eq.f32.partialorder %v401, %v423
      %vm436 = vcmp.eq.f32.partialorder %v402, %v426
      %vm437 = vcmp.eq.f32.partialorder %v403, %v429
      %v438 = vsel %vm430, %v405, 64
      %v439 = vsel %vm431, %v405, 64
      %v440 = vsel %vm432, %v405, 64
      %v441 = vsel %vm433, %v405, 64
      %v442 = vsel %vm434, %v405, 64
      %v443 = vsel %vm435, %v405, 64
      %v444 = vsel %vm436, %v405, 64
      %v445 = vsel %vm437, %v405, 64
      %v446 = vsel %vm372, %v438, 2147483647
      %v447 = vand.u32 %v446, 65535
      %v448 = vshra.s32 %v446, 16
      %v449 = vcvt.s32.f32 %v447
      %v450 = vcvt.s32.f32 %v448
      %451 = vmin.xlane.f32.xlu0 %v450
      %v452 = vpop.xlane.xlu0 %451
      %vm453 = vcmp.eq.f32.partialorder %v450, %v452
      %v454 = vsel %vm453, %v449, inf
      %455 = vmin.xlane.f32.xlu0 %v454
      %v456 = vpop.xlane.xlu0 %455
      %v457 = vcvt.f32.s32 %v456
      %v458 = vcvt.f32.s32 %v452
      %v459 = vshll.u32 %v458, 16
      %v460 = vadd.s32 %v459, %v457
      %v461 = vsel %vm372, %v439, 2147483647
      %v462 = vand.u32 %v461, 65535
      %v463 = vshra.s32 %v461, 16
      %v464 = vcvt.s32.f32 %v462
      %v465 = vcvt.s32.f32 %v463
      %466 = vmin.xlane.f32.xlu0 %v465
      %v467 = vpop.xlane.xlu0 %466
      %vm468 = vcmp.eq.f32.partialorder %v465, %v467
      %v469 = vsel %vm468, %v464, inf
      %470 = vmin.xlane.f32.xlu0 %v469
      %v471 = vpop.xlane.xlu0 %470
      %v472 = vcvt.f32.s32 %v471
      %v473 = vcvt.f32.s32 %v467
      %v474 = vshll.u32 %v473, 16
      %v475 = vadd.s32 %v474, %v472
      %v476 = vsel %vm372, %v440, 2147483647
      %v477 = vand.u32 %v476, 65535
      %v478 = vshra.s32 %v476, 16
      %v479 = vcvt.s32.f32 %v477
      %v480 = vcvt.s32.f32 %v478
      %481 = vmin.xlane.f32.xlu0 %v480
      %v482 = vpop.xlane.xlu0 %481
      %vm483 = vcmp.eq.f32.partialorder %v480, %v482
      %v484 = vsel %vm483, %v479, inf
      %485 = vmin.xlane.f32.xlu0 %v484
      %v486 = vpop.xlane.xlu0 %485
      %v487 = vcvt.f32.s32 %v486
      %v488 = vcvt.f32.s32 %v482
      %v489 = vshll.u32 %v488, 16
      %v490 = vadd.s32 %v489, %v487
      %v491 = vsel %vm372, %v441, 2147483647
      %v492 = vand.u32 %v491, 65535
      %v493 = vshra.s32 %v491, 16
      %v494 = vcvt.s32.f32 %v492
      %v495 = vcvt.s32.f32 %v493
      %496 = vmin.xlane.f32.xlu0 %v495
      %v497 = vpop.xlane.xlu0 %496
      %vm498 = vcmp.eq.f32.partialorder %v495, %v497
      %v499 = vsel %vm498, %v494, inf
      %500 = vmin.xlane.f32.xlu0 %v499
      %v501 = vpop.xlane.xlu0 %500
      %v502 = vcvt.f32.s32 %v501
      %v503 = vcvt.f32.s32 %v497
      %v504 = vshll.u32 %v503, 16
      %v505 = vadd.s32 %v504, %v502
      %v506 = vsel %vm372, %v442, 2147483647
      %v507 = vand.u32 %v506, 65535
      %v508 = vshra.s32 %v506, 16
      %v509 = vcvt.s32.f32 %v507
      %v510 = vcvt.s32.f32 %v508
      %511 = vmin.xlane.f32.xlu0 %v510
      %v512 = vpop.xlane.xlu0 %511
      %vm513 = vcmp.eq.f32.partialorder %v510, %v512
      %v514 = vsel %vm513, %v509, inf
      %515 = vmin.xlane.f32.xlu0 %v514
      %v516 = vpop.xlane.xlu0 %515
      %v517 = vcvt.f32.s32 %v516
      %v518 = vcvt.f32.s32 %v512
      %v519 = vshll.u32 %v518, 16
      %v520 = vadd.s32 %v519, %v517
      %v521 = vsel %vm372, %v443, 2147483647
      %v522 = vand.u32 %v521, 65535
      %v523 = vshra.s32 %v521, 16
      %v524 = vcvt.s32.f32 %v522
      %v525 = vcvt.s32.f32 %v523
      %526 = vmin.xlane.f32.xlu0 %v525
      %v527 = vpop.xlane.xlu0 %526
      %vm528 = vcmp.eq.f32.partialorder %v525, %v527
      %v529 = vsel %vm528, %v524, inf
      %530 = vmin.xlane.f32.xlu0 %v529
      %v531 = vpop.xlane.xlu0 %530
      %v532 = vcvt.f32.s32 %v531
      %v533 = vcvt.f32.s32 %v527
      %v534 = vshll.u32 %v533, 16
      %v535 = vadd.s32 %v534, %v532
      %v536 = vsel %vm372, %v444, 2147483647
      %v537 = vand.u32 %v536, 65535
      %v538 = vshra.s32 %v536, 16
      %v539 = vcvt.s32.f32 %v537
      %v540 = vcvt.s32.f32 %v538
      %541 = vmin.xlane.f32.xlu0 %v540
      %v542 = vpop.xlane.xlu0 %541
      %vm543 = vcmp.eq.f32.partialorder %v540, %v542
      %v544 = vsel %vm543, %v539, inf
      %545 = vmin.xlane.f32.xlu0 %v544
      %v546 = vpop.xlane.xlu0 %545
      %v547 = vcvt.f32.s32 %v546
      %v548 = vcvt.f32.s32 %v542
      %v549 = vshll.u32 %v548, 16
      %v550 = vadd.s32 %v549, %v547
      %v551 = vsel %vm372, %v445, 2147483647
      %v552 = vand.u32 %v551, 65535
      %v553 = vshra.s32 %v551, 16
      %v554 = vcvt.s32.f32 %v552
      %v555 = vcvt.s32.f32 %v553
      %556 = vmin.xlane.f32.xlu0 %v555
      %v557 = vpop.xlane.xlu0 %556
      %vm558 = vcmp.eq.f32.partialorder %v555, %v557
      %v559 = vsel %vm558, %v554, inf
      %560 = vmin.xlane.f32.xlu0 %v559
      %v561 = vpop.xlane.xlu0 %560
      %v562 = vcvt.f32.s32 %v561
      %v563 = vcvt.f32.s32 %v557
      %v564 = vshll.u32 %v563, 16
      %v565 = vadd.s32 %v564, %v562
      %vm566 = vcmp.eq.s32.totalorder %v405, %v460
      %vm567 = vcmp.eq.s32.totalorder %v405, %v475
      %vm568 = vcmp.eq.s32.totalorder %v405, %v490
      %vm569 = vcmp.eq.s32.totalorder %v405, %v505
      %vm570 = vcmp.eq.s32.totalorder %v405, %v520
      %vm571 = vcmp.eq.s32.totalorder %v405, %v535
      %vm572 = vcmp.eq.s32.totalorder %v405, %v550
      %vm573 = vcmp.eq.s32.totalorder %v405, %v565
      %v574 = vsel %vm566, -inf, %v396
      %v575 = vsel %vm567, -inf, %v397
      %v576 = vsel %vm568, -inf, %v398
      %v577 = vsel %vm569, -inf, %v399
      %v578 = vsel %vm570, -inf, %v400
      %v579 = vsel %vm571, -inf, %v401
      %v580 = vsel %vm572, -inf, %v402
      %v581 = vsel %vm573, -inf, %v403
      %v582 = vsel %vm372, %v574, -inf
      %583 = vmax.xlane.f32.xlu0 %v582
      %v584 = vpop.xlane.xlu0 %583
      %v585 = vsel %vm372, %v575, -inf
      %586 = vmax.xlane.f32.xlu0 %v585
      %v587 = vpop.xlane.xlu0 %586
      %v588 = vsel %vm372, %v576, -inf
      %589 = vmax.xlane.f32.xlu0 %v588
      %v590 = vpop.xlane.xlu0 %589
      %v591 = vsel %vm372, %v577, -inf
      %592 = vmax.xlane.f32.xlu0 %v591
      %v593 = vpop.xlane.xlu0 %592
      %v594 = vsel %vm372, %v578, -inf
      %595 = vmax.xlane.f32.xlu0 %v594
      %v596 = vpop.xlane.xlu0 %595
      %v597 = vsel %vm372, %v579, -inf
      %598 = vmax.xlane.f32.xlu0 %v597
      %v599 = vpop.xlane.xlu0 %598
      %v600 = vsel %vm372, %v580, -inf
      %601 = vmax.xlane.f32.xlu0 %v600
      %v602 = vpop.xlane.xlu0 %601
      %v603 = vsel %vm372, %v581, -inf
      %604 = vmax.xlane.f32.xlu0 %v603
      %v605 = vpop.xlane.xlu0 %604
      %vm606 = vcmp.eq.f32.partialorder %v574, %v584
      %vm607 = vcmp.eq.f32.partialorder %v575, %v587
      %vm608 = vcmp.eq.f32.partialorder %v576, %v590
      %vm609 = vcmp.eq.f32.partialorder %v577, %v593
      %vm610 = vcmp.eq.f32.partialorder %v578, %v596
      %vm611 = vcmp.eq.f32.partialorder %v579, %v599
      %vm612 = vcmp.eq.f32.partialorder %v580, %v602
      %vm613 = vcmp.eq.f32.partialorder %v581, %v605
      %v614 = vsel %vm606, %v405, 64
      %v615 = vsel %vm607, %v405, 64
      %v616 = vsel %vm608, %v405, 64
      %v617 = vsel %vm609, %v405, 64
      %v618 = vsel %vm610, %v405, 64
      %v619 = vsel %vm611, %v405, 64
      %v620 = vsel %vm612, %v405, 64
      %v621 = vsel %vm613, %v405, 64
      %v622 = vsel %vm372, %v614, 2147483647
      %v623 = vand.u32 %v622, 65535
      %v624 = vshra.s32 %v622, 16
      %v625 = vcvt.s32.f32 %v623
      %v626 = vcvt.s32.f32 %v624
      %627 = vmin.xlane.f32.xlu0 %v626
      %v628 = vpop.xlane.xlu0 %627
      %vm629 = vcmp.eq.f32.partialorder %v626, %v628
      %v630 = vsel %vm629, %v625, inf
      %631 = vmin.xlane.f32.xlu0 %v630
      %v632 = vpop.xlane.xlu0 %631
      %v633 = vcvt.f32.s32 %v632
      %v634 = vcvt.f32.s32 %v628
      %v635 = vshll.u32 %v634, 16
      %v636 = vadd.s32 %v635, %v633
      %v637 = vsel %vm372, %v615, 2147483647
      %v638 = vand.u32 %v637, 65535
      %v639 = vshra.s32 %v637, 16
      %v640 = vcvt.s32.f32 %v638
      %v641 = vcvt.s32.f32 %v639
      %642 = vmin.xlane.f32.xlu0 %v641
      %v643 = vpop.xlane.xlu0 %642
      %vm644 = vcmp.eq.f32.partialorder %v641, %v643
      %v645 = vsel %vm644, %v640, inf
      %646 = vmin.xlane.f32.xlu0 %v645
      %v647 = vpop.xlane.xlu0 %646
      %v648 = vcvt.f32.s32 %v647
      %v649 = vcvt.f32.s32 %v643
      %v650 = vshll.u32 %v649, 16
      %v651 = vadd.s32 %v650, %v648
      %v652 = vsel %vm372, %v616, 2147483647
      %v653 = vand.u32 %v652, 65535
      %v654 = vshra.s32 %v652, 16
      %v655 = vcvt.s32.f32 %v653
      %v656 = vcvt.s32.f32 %v654
      %657 = vmin.xlane.f32.xlu0 %v656
      %v658 = vpop.xlane.xlu0 %657
      %vm659 = vcmp.eq.f32.partialorder %v656, %v658
      %v660 = vsel %vm659, %v655, inf
      %661 = vmin.xlane.f32.xlu0 %v660
      %v662 = vpop.xlane.xlu0 %661
      %v663 = vcvt.f32.s32 %v662
      %v664 = vcvt.f32.s32 %v658
      %v665 = vshll.u32 %v664, 16
      %v666 = vadd.s32 %v665, %v663
      %v667 = vsel %vm372, %v617, 2147483647
      %v668 = vand.u32 %v667, 65535
      %v669 = vshra.s32 %v667, 16
      %v670 = vcvt.s32.f32 %v668
      %v671 = vcvt.s32.f32 %v669
      %672 = vmin.xlane.f32.xlu0 %v671
      %v673 = vpop.xlane.xlu0 %672
      %vm674 = vcmp.eq.f32.partialorder %v671, %v673
      %v675 = vsel %vm674, %v670, inf
      %676 = vmin.xlane.f32.xlu0 %v675
      %v677 = vpop.xlane.xlu0 %676
      %v678 = vcvt.f32.s32 %v677
      %v679 = vcvt.f32.s32 %v673
      %v680 = vshll.u32 %v679, 16
      %v681 = vadd.s32 %v680, %v678
      %v682 = vsel %vm372, %v618, 2147483647
      %v683 = vand.u32 %v682, 65535
      %v684 = vshra.s32 %v682, 16
      %v685 = vcvt.s32.f32 %v683
      %v686 = vcvt.s32.f32 %v684
      %687 = vmin.xlane.f32.xlu0 %v686
      %v688 = vpop.xlane.xlu0 %687
      %vm689 = vcmp.eq.f32.partialorder %v686, %v688
      %v690 = vsel %vm689, %v685, inf
      %691 = vmin.xlane.f32.xlu0 %v690
      %v692 = vpop.xlane.xlu0 %691
      %v693 = vcvt.f32.s32 %v692
      %v694 = vcvt.f32.s32 %v688
      %v695 = vshll.u32 %v694, 16
      %v696 = vadd.s32 %v695, %v693
      %v697 = vsel %vm372, %v619, 2147483647
      %v698 = vand.u32 %v697, 65535
      %v699 = vshra.s32 %v697, 16
      %v700 = vcvt.s32.f32 %v698
      %v701 = vcvt.s32.f32 %v699
      %702 = vmin.xlane.f32.xlu0 %v701
      %v703 = vpop.xlane.xlu0 %702
      %vm704 = vcmp.eq.f32.partialorder %v701, %v703
      %v705 = vsel %vm704, %v700, inf
      %706 = vmin.xlane.f32.xlu0 %v705
      %v707 = vpop.xlane.xlu0 %706
      %v708 = vcvt.f32.s32 %v707
      %v709 = vcvt.f32.s32 %v703
      %v710 = vshll.u32 %v709, 16
      %v711 = vadd.s32 %v710, %v708
      %v712 = vsel %vm372, %v620, 2147483647
      %v713 = vand.u32 %v712, 65535
      %v714 = vshra.s32 %v712, 16
      %v715 = vcvt.s32.f32 %v713
      %v716 = vcvt.s32.f32 %v714
      %717 = vmin.xlane.f32.xlu0 %v716
      %v718 = vpop.xlane.xlu0 %717
      %vm719 = vcmp.eq.f32.partialorder %v716, %v718
      %v720 = vsel %vm719, %v715, inf
      %721 = vmin.xlane.f32.xlu0 %v720
      %v722 = vpop.xlane.xlu0 %721
      %v723 = vcvt.f32.s32 %v722
      %v724 = vcvt.f32.s32 %v718
      %v725 = vshll.u32 %v724, 16
      %v726 = vadd.s32 %v725, %v723
      %v727 = vsel %vm372, %v621, 2147483647
      %v728 = vand.u32 %v727, 65535
      %v729 = vshra.s32 %v727, 16
      %v730 = vcvt.s32.f32 %v728
      %v731 = vcvt.s32.f32 %v729
      %732 = vmin.xlane.f32.xlu0 %v731
      %v733 = vpop.xlane.xlu0 %732
      %vm734 = vcmp.eq.f32.partialorder %v731, %v733
      %v735 = vsel %vm734, %v730, inf
      %736 = vmin.xlane.f32.xlu0 %v735
      %v737 = vpop.xlane.xlu0 %736
      %v738 = vcvt.f32.s32 %v737
      %v739 = vcvt.f32.s32 %v733
      %v740 = vshll.u32 %v739, 16
      %v741 = vadd.s32 %v740, %v738
      %vm742 = vcmp.eq.s32.totalorder %v405, %v636
      %vm743 = vcmp.eq.s32.totalorder %v405, %v651
      %vm744 = vcmp.eq.s32.totalorder %v405, %v666
      %vm745 = vcmp.eq.s32.totalorder %v405, %v681
      %vm746 = vcmp.eq.s32.totalorder %v405, %v696
      %vm747 = vcmp.eq.s32.totalorder %v405, %v711
      %vm748 = vcmp.eq.s32.totalorder %v405, %v726
      %vm749 = vcmp.eq.s32.totalorder %v405, %v741
      %v750 = vsel %vm742, -inf, %v574
      %v751 = vsel %vm743, -inf, %v575
      %v752 = vsel %vm744, -inf, %v576
      %v753 = vsel %vm745, -inf, %v577
      %v754 = vsel %vm746, -inf, %v578
      %v755 = vsel %vm747, -inf, %v579
      %v756 = vsel %vm748, -inf, %v580
      %v757 = vsel %vm749, -inf, %v581
      %v758 = vsel %vm372, %v750, -inf
      %759 = vmax.xlane.f32.xlu0 %v758
      %v760 = vpop.xlane.xlu0 %759
      %v761 = vsel %vm372, %v751, -inf
      %762 = vmax.xlane.f32.xlu0 %v761
      %v763 = vpop.xlane.xlu0 %762
      %v764 = vsel %vm372, %v752, -inf
      %765 = vmax.xlane.f32.xlu0 %v764
      %v766 = vpop.xlane.xlu0 %765
      %v767 = vsel %vm372, %v753, -inf
      %768 = vmax.xlane.f32.xlu0 %v767
      %v769 = vpop.xlane.xlu0 %768
      %v770 = vsel %vm372, %v754, -inf
      %771 = vmax.xlane.f32.xlu0 %v770
      %v772 = vpop.xlane.xlu0 %771
      %v773 = vsel %vm372, %v755, -inf
      %774 = vmax.xlane.f32.xlu0 %v773
      %v775 = vpop.xlane.xlu0 %774
      %v776 = vsel %vm372, %v756, -inf
      %777 = vmax.xlane.f32.xlu0 %v776
      %v778 = vpop.xlane.xlu0 %777
      %v779 = vsel %vm372, %v757, -inf
      %780 = vmax.xlane.f32.xlu0 %v779
      %v781 = vpop.xlane.xlu0 %780
      %vm782 = vcmp.eq.f32.partialorder %v750, %v760
      %vm783 = vcmp.eq.f32.partialorder %v751, %v763
      %vm784 = vcmp.eq.f32.partialorder %v752, %v766
      %vm785 = vcmp.eq.f32.partialorder %v753, %v769
      %vm786 = vcmp.eq.f32.partialorder %v754, %v772
      %vm787 = vcmp.eq.f32.partialorder %v755, %v775
      %vm788 = vcmp.eq.f32.partialorder %v756, %v778
      %vm789 = vcmp.eq.f32.partialorder %v757, %v781
      %v790 = vsel %vm782, %v405, 64
      %v791 = vsel %vm783, %v405, 64
      %v792 = vsel %vm784, %v405, 64
      %v793 = vsel %vm785, %v405, 64
      %v794 = vsel %vm786, %v405, 64
      %v795 = vsel %vm787, %v405, 64
      %v796 = vsel %vm788, %v405, 64
      %v797 = vsel %vm789, %v405, 64
      %v798 = vsel %vm372, %v790, 2147483647
      %v799 = vand.u32 %v798, 65535
      %v800 = vshra.s32 %v798, 16
      %v801 = vcvt.s32.f32 %v799
      %v802 = vcvt.s32.f32 %v800
      %803 = vmin.xlane.f32.xlu0 %v802
      %v804 = vpop.xlane.xlu0 %803
      %vm805 = vcmp.eq.f32.partialorder %v802, %v804
      %v806 = vsel %vm805, %v801, inf
      %807 = vmin.xlane.f32.xlu0 %v806
      %v808 = vpop.xlane.xlu0 %807
      %v809 = vcvt.f32.s32 %v808
      %v810 = vcvt.f32.s32 %v804
      %v811 = vshll.u32 %v810, 16
      %v812 = vadd.s32 %v811, %v809
      %v813 = vsel %vm372, %v791, 2147483647
      %v814 = vand.u32 %v813, 65535
      %v815 = vshra.s32 %v813, 16
      %v816 = vcvt.s32.f32 %v814
      %v817 = vcvt.s32.f32 %v815
      %818 = vmin.xlane.f32.xlu0 %v817
      %v819 = vpop.xlane.xlu0 %818
      %vm820 = vcmp.eq.f32.partialorder %v817, %v819
      %v821 = vsel %vm820, %v816, inf
      %822 = vmin.xlane.f32.xlu0 %v821
      %v823 = vpop.xlane.xlu0 %822
      %v824 = vcvt.f32.s32 %v823
      %v825 = vcvt.f32.s32 %v819
      %v826 = vshll.u32 %v825, 16
      %v827 = vadd.s32 %v826, %v824
      %v828 = vsel %vm372, %v792, 2147483647
      %v829 = vand.u32 %v828, 65535
      %v830 = vshra.s32 %v828, 16
      %v831 = vcvt.s32.f32 %v829
      %v832 = vcvt.s32.f32 %v830
      %833 = vmin.xlane.f32.xlu0 %v832
      %v834 = vpop.xlane.xlu0 %833
      %vm835 = vcmp.eq.f32.partialorder %v832, %v834
      %v836 = vsel %vm835, %v831, inf
      %837 = vmin.xlane.f32.xlu0 %v836
      %v838 = vpop.xlane.xlu0 %837
      %v839 = vcvt.f32.s32 %v838
      %v840 = vcvt.f32.s32 %v834
      %v841 = vshll.u32 %v840, 16
      %v842 = vadd.s32 %v841, %v839
      %v843 = vsel %vm372, %v793, 2147483647
      %v844 = vand.u32 %v843, 65535
      %v845 = vshra.s32 %v843, 16
      %v846 = vcvt.s32.f32 %v844
      %v847 = vcvt.s32.f32 %v845
      %848 = vmin.xlane.f32.xlu0 %v847
      %v849 = vpop.xlane.xlu0 %848
      %vm850 = vcmp.eq.f32.partialorder %v847, %v849
      %v851 = vsel %vm850, %v846, inf
      %852 = vmin.xlane.f32.xlu0 %v851
      %v853 = vpop.xlane.xlu0 %852
      %v854 = vcvt.f32.s32 %v853
      %v855 = vcvt.f32.s32 %v849
      %v856 = vshll.u32 %v855, 16
      %v857 = vadd.s32 %v856, %v854
      %v858 = vsel %vm372, %v794, 2147483647
      %v859 = vand.u32 %v858, 65535
      %v860 = vshra.s32 %v858, 16
      %v861 = vcvt.s32.f32 %v859
      %v862 = vcvt.s32.f32 %v860
      %863 = vmin.xlane.f32.xlu0 %v862
      %v864 = vpop.xlane.xlu0 %863
      %vm865 = vcmp.eq.f32.partialorder %v862, %v864
      %v866 = vsel %vm865, %v861, inf
      %867 = vmin.xlane.f32.xlu0 %v866
      %v868 = vpop.xlane.xlu0 %867
      %v869 = vcvt.f32.s32 %v868
      %v870 = vcvt.f32.s32 %v864
      %v871 = vshll.u32 %v870, 16
      %v872 = vadd.s32 %v871, %v869
      %v873 = vsel %vm372, %v795, 2147483647
      %v874 = vand.u32 %v873, 65535
      %v875 = vshra.s32 %v873, 16
      %v876 = vcvt.s32.f32 %v874
      %v877 = vcvt.s32.f32 %v875
      %878 = vmin.xlane.f32.xlu0 %v877
      %v879 = vpop.xlane.xlu0 %878
      %vm880 = vcmp.eq.f32.partialorder %v877, %v879
      %v881 = vsel %vm880, %v876, inf
      %882 = vmin.xlane.f32.xlu0 %v881
      %v883 = vpop.xlane.xlu0 %882
      %v884 = vcvt.f32.s32 %v883
      %v885 = vcvt.f32.s32 %v879
      %v886 = vshll.u32 %v885, 16
      %v887 = vadd.s32 %v886, %v884
      %v888 = vsel %vm372, %v796, 2147483647
      %v889 = vand.u32 %v888, 65535
      %v890 = vshra.s32 %v888, 16
      %v891 = vcvt.s32.f32 %v889
      %v892 = vcvt.s32.f32 %v890
      %893 = vmin.xlane.f32.xlu0 %v892
      %v894 = vpop.xlane.xlu0 %893
      %vm895 = vcmp.eq.f32.partialorder %v892, %v894
      %v896 = vsel %vm895, %v891, inf
      %897 = vmin.xlane.f32.xlu0 %v896
      %v898 = vpop.xlane.xlu0 %897
      %v899 = vcvt.f32.s32 %v898
      %v900 = vcvt.f32.s32 %v894
      %v901 = vshll.u32 %v900, 16
      %v902 = vadd.s32 %v901, %v899
      %v903 = vsel %vm372, %v797, 2147483647
      %v904 = vand.u32 %v903, 65535
      %v905 = vshra.s32 %v903, 16
      %v906 = vcvt.s32.f32 %v904
      %v907 = vcvt.s32.f32 %v905
      %908 = vmin.xlane.f32.xlu0 %v907
      %v909 = vpop.xlane.xlu0 %908
      %vm910 = vcmp.eq.f32.partialorder %v907, %v909
      %v911 = vsel %vm910, %v906, inf
      %912 = vmin.xlane.f32.xlu0 %v911
      %v913 = vpop.xlane.xlu0 %912
      %v914 = vcvt.f32.s32 %v913
      %v915 = vcvt.f32.s32 %v909
      %v916 = vshll.u32 %v915, 16
      %v917 = vadd.s32 %v916, %v914
      %vm918 = vcmp.eq.s32.totalorder %v405, %v812
      %vm919 = vcmp.eq.s32.totalorder %v405, %v827
      %vm920 = vcmp.eq.s32.totalorder %v405, %v842
      %vm921 = vcmp.eq.s32.totalorder %v405, %v857
      %vm922 = vcmp.eq.s32.totalorder %v405, %v872
      %vm923 = vcmp.eq.s32.totalorder %v405, %v887
      %vm924 = vcmp.eq.s32.totalorder %v405, %v902
      %vm925 = vcmp.eq.s32.totalorder %v405, %v917
      %v926 = vsel %vm918, -inf, %v750
      %v927 = vsel %vm919, -inf, %v751
      %v928 = vsel %vm920, -inf, %v752
      %v929 = vsel %vm921, -inf, %v753
      %v930 = vsel %vm922, -inf, %v754
      %v931 = vsel %vm923, -inf, %v755
      %v932 = vsel %vm924, -inf, %v756
      %v933 = vsel %vm925, -inf, %v757
      %v934 = vsel %vm372, %v926, -inf
      %935 = vmax.xlane.f32.xlu0 %v934
      %v936 = vpop.xlane.xlu0 %935
      %v937 = vsel %vm372, %v927, -inf
      %938 = vmax.xlane.f32.xlu0 %v937
      %v939 = vpop.xlane.xlu0 %938
      %v940 = vsel %vm372, %v928, -inf
      %941 = vmax.xlane.f32.xlu0 %v940
      %v942 = vpop.xlane.xlu0 %941
      %v943 = vsel %vm372, %v929, -inf
      %944 = vmax.xlane.f32.xlu0 %v943
      %v945 = vpop.xlane.xlu0 %944
      %v946 = vsel %vm372, %v930, -inf
      %947 = vmax.xlane.f32.xlu0 %v946
      %v948 = vpop.xlane.xlu0 %947
      %v949 = vsel %vm372, %v931, -inf
      %950 = vmax.xlane.f32.xlu0 %v949
      %v951 = vpop.xlane.xlu0 %950
      %v952 = vsel %vm372, %v932, -inf
      %953 = vmax.xlane.f32.xlu0 %v952
      %v954 = vpop.xlane.xlu0 %953
      %v955 = vsel %vm372, %v933, -inf
      %956 = vmax.xlane.f32.xlu0 %v955
      %v957 = vpop.xlane.xlu0 %956
      %vm958 = vcmp.eq.f32.partialorder %v926, %v936
      %vm959 = vcmp.eq.f32.partialorder %v927, %v939
      %vm960 = vcmp.eq.f32.partialorder %v928, %v942
      %vm961 = vcmp.eq.f32.partialorder %v929, %v945
      %vm962 = vcmp.eq.f32.partialorder %v930, %v948
      %vm963 = vcmp.eq.f32.partialorder %v931, %v951
      %vm964 = vcmp.eq.f32.partialorder %v932, %v954
      %vm965 = vcmp.eq.f32.partialorder %v933, %v957
      %v966 = vsel %vm958, %v405, 64
      %v967 = vsel %vm959, %v405, 64
      %v968 = vsel %vm960, %v405, 64
      %v969 = vsel %vm961, %v405, 64
      %v970 = vsel %vm962, %v405, 64
      %v971 = vsel %vm963, %v405, 64
      %v972 = vsel %vm964, %v405, 64
      %v973 = vsel %vm965, %v405, 64
      %v974 = vsel %vm372, %v966, 2147483647
      %v975 = vand.u32 %v974, 65535
      %v976 = vshra.s32 %v974, 16
      %v977 = vcvt.s32.f32 %v975
      %v978 = vcvt.s32.f32 %v976
      %979 = vmin.xlane.f32.xlu0 %v978
      %v980 = vpop.xlane.xlu0 %979
      %vm981 = vcmp.eq.f32.partialorder %v978, %v980
      %v982 = vsel %vm981, %v977, inf
      %983 = vmin.xlane.f32.xlu0 %v982
      %v984 = vpop.xlane.xlu0 %983
      %v985 = vcvt.f32.s32 %v984
      %v986 = vcvt.f32.s32 %v980
      %v987 = vshll.u32 %v986, 16
      %v988 = vadd.s32 %v987, %v985
      %v989 = vsel %vm372, %v967, 2147483647
      %v990 = vand.u32 %v989, 65535
      %v991 = vshra.s32 %v989, 16
      %v992 = vcvt.s32.f32 %v990
      %v993 = vcvt.s32.f32 %v991
      %994 = vmin.xlane.f32.xlu0 %v993
      %v995 = vpop.xlane.xlu0 %994
      %vm996 = vcmp.eq.f32.partialorder %v993, %v995
      %v997 = vsel %vm996, %v992, inf
      %998 = vmin.xlane.f32.xlu0 %v997
      %v999 = vpop.xlane.xlu0 %998
      %v1000 = vcvt.f32.s32 %v999
      %v1001 = vcvt.f32.s32 %v995
      %v1002 = vshll.u32 %v1001, 16
      %v1003 = vadd.s32 %v1002, %v1000
      %v1004 = vsel %vm372, %v968, 2147483647
      %v1005 = vand.u32 %v1004, 65535
      %v1006 = vshra.s32 %v1004, 16
      %v1007 = vcvt.s32.f32 %v1005
      %v1008 = vcvt.s32.f32 %v1006
      %1009 = vmin.xlane.f32.xlu0 %v1008
      %v1010 = vpop.xlane.xlu0 %1009
      %vm1011 = vcmp.eq.f32.partialorder %v1008, %v1010
      %v1012 = vsel %vm1011, %v1007, inf
      %1013 = vmin.xlane.f32.xlu0 %v1012
      %v1014 = vpop.xlane.xlu0 %1013
      %v1015 = vcvt.f32.s32 %v1014
      %v1016 = vcvt.f32.s32 %v1010
      %v1017 = vshll.u32 %v1016, 16
      %v1018 = vadd.s32 %v1017, %v1015
      %v1019 = vsel %vm372, %v969, 2147483647
      %v1020 = vand.u32 %v1019, 65535
      %v1021 = vshra.s32 %v1019, 16
      %v1022 = vcvt.s32.f32 %v1020
      %v1023 = vcvt.s32.f32 %v1021
      %1024 = vmin.xlane.f32.xlu0 %v1023
      %v1025 = vpop.xlane.xlu0 %1024
      %vm1026 = vcmp.eq.f32.partialorder %v1023, %v1025
      %v1027 = vsel %vm1026, %v1022, inf
      %1028 = vmin.xlane.f32.xlu0 %v1027
      %v1029 = vpop.xlane.xlu0 %1028
      %v1030 = vcvt.f32.s32 %v1029
      %v1031 = vcvt.f32.s32 %v1025
      %v1032 = vshll.u32 %v1031, 16
      %v1033 = vadd.s32 %v1032, %v1030
      %v1034 = vsel %vm372, %v970, 2147483647
      %v1035 = vand.u32 %v1034, 65535
      %v1036 = vshra.s32 %v1034, 16
      %v1037 = vcvt.s32.f32 %v1035
      %v1038 = vcvt.s32.f32 %v1036
      %1039 = vmin.xlane.f32.xlu0 %v1038
      %v1040 = vpop.xlane.xlu0 %1039
      %vm1041 = vcmp.eq.f32.partialorder %v1038, %v1040
      %v1042 = vsel %vm1041, %v1037, inf
      %1043 = vmin.xlane.f32.xlu0 %v1042
      %v1044 = vpop.xlane.xlu0 %1043
      %v1045 = vcvt.f32.s32 %v1044
      %v1046 = vcvt.f32.s32 %v1040
      %v1047 = vshll.u32 %v1046, 16
      %v1048 = vadd.s32 %v1047, %v1045
      %v1049 = vsel %vm372, %v971, 2147483647
      %v1050 = vand.u32 %v1049, 65535
      %v1051 = vshra.s32 %v1049, 16
      %v1052 = vcvt.s32.f32 %v1050
      %v1053 = vcvt.s32.f32 %v1051
      %1054 = vmin.xlane.f32.xlu0 %v1053
      %v1055 = vpop.xlane.xlu0 %1054
      %vm1056 = vcmp.eq.f32.partialorder %v1053, %v1055
      %v1057 = vsel %vm1056, %v1052, inf
      %1058 = vmin.xlane.f32.xlu0 %v1057
      %v1059 = vpop.xlane.xlu0 %1058
      %v1060 = vcvt.f32.s32 %v1059
      %v1061 = vcvt.f32.s32 %v1055
      %v1062 = vshll.u32 %v1061, 16
      %v1063 = vadd.s32 %v1062, %v1060
      %v1064 = vsel %vm372, %v972, 2147483647
      %v1065 = vand.u32 %v1064, 65535
      %v1066 = vshra.s32 %v1064, 16
      %v1067 = vcvt.s32.f32 %v1065
      %v1068 = vcvt.s32.f32 %v1066
      %1069 = vmin.xlane.f32.xlu0 %v1068
      %v1070 = vpop.xlane.xlu0 %1069
      %vm1071 = vcmp.eq.f32.partialorder %v1068, %v1070
      %v1072 = vsel %vm1071, %v1067, inf
      %1073 = vmin.xlane.f32.xlu0 %v1072
      %v1074 = vpop.xlane.xlu0 %1073
      %v1075 = vcvt.f32.s32 %v1074
      %v1076 = vcvt.f32.s32 %v1070
      %v1077 = vshll.u32 %v1076, 16
      %v1078 = vadd.s32 %v1077, %v1075
      %v1079 = vsel %vm372, %v973, 2147483647
      %v1080 = vand.u32 %v1079, 65535
      %v1081 = vshra.s32 %v1079, 16
      %v1082 = vcvt.s32.f32 %v1080
      %v1083 = vcvt.s32.f32 %v1081
      %1084 = vmin.xlane.f32.xlu0 %v1083
      %v1085 = vpop.xlane.xlu0 %1084
      %vm1086 = vcmp.eq.f32.partialorder %v1083, %v1085
      %v1087 = vsel %vm1086, %v1082, inf
      %1088 = vmin.xlane.f32.xlu0 %v1087
      %v1089 = vpop.xlane.xlu0 %1088
      %v1090 = vcvt.f32.s32 %v1089
      %v1091 = vcvt.f32.s32 %v1085
      %v1092 = vshll.u32 %v1091, 16
      %v1093 = vadd.s32 %v1092, %v1090
      %vm1094 = vcmp.eq.s32.totalorder %v405, %v988
      %vm1095 = vcmp.eq.s32.totalorder %v405, %v1003
      %vm1096 = vcmp.eq.s32.totalorder %v405, %v1018
      %vm1097 = vcmp.eq.s32.totalorder %v405, %v1033
      %vm1098 = vcmp.eq.s32.totalorder %v405, %v1048
      %vm1099 = vcmp.eq.s32.totalorder %v405, %v1063
      %vm1100 = vcmp.eq.s32.totalorder %v405, %v1078
      %vm1101 = vcmp.eq.s32.totalorder %v405, %v1093
      %v1102 = vsel %vm1094, -inf, %v926
      %v1103 = vsel %vm1095, -inf, %v927
      %v1104 = vsel %vm1096, -inf, %v928
      %v1105 = vsel %vm1097, -inf, %v929
      %v1106 = vsel %vm1098, -inf, %v930
      %v1107 = vsel %vm1099, -inf, %v931
      %v1108 = vsel %vm1100, -inf, %v932
      %v1109 = vsel %vm1101, -inf, %v933
      %v1110 = vsel %vm372, %v1102, -inf
      %1111 = vmax.xlane.f32.xlu0 %v1110
      %v1112 = vpop.xlane.xlu0 %1111
      %v1113 = vsel %vm372, %v1103, -inf
      %1114 = vmax.xlane.f32.xlu0 %v1113
      %v1115 = vpop.xlane.xlu0 %1114
      %v1116 = vsel %vm372, %v1104, -inf
      %1117 = vmax.xlane.f32.xlu0 %v1116
      %v1118 = vpop.xlane.xlu0 %1117
      %v1119 = vsel %vm372, %v1105, -inf
      %1120 = vmax.xlane.f32.xlu0 %v1119
      %v1121 = vpop.xlane.xlu0 %1120
      %v1122 = vsel %vm372, %v1106, -inf
      %1123 = vmax.xlane.f32.xlu0 %v1122
      %v1124 = vpop.xlane.xlu0 %1123
      %v1125 = vsel %vm372, %v1107, -inf
      %1126 = vmax.xlane.f32.xlu0 %v1125
      %v1127 = vpop.xlane.xlu0 %1126
      %v1128 = vsel %vm372, %v1108, -inf
      %1129 = vmax.xlane.f32.xlu0 %v1128
      %v1130 = vpop.xlane.xlu0 %1129
      %v1131 = vsel %vm372, %v1109, -inf
      %1132 = vmax.xlane.f32.xlu0 %v1131
      %v1133 = vpop.xlane.xlu0 %1132
      %vm1134 = vcmp.eq.f32.partialorder %v1102, %v1112
      %vm1135 = vcmp.eq.f32.partialorder %v1103, %v1115
      %vm1136 = vcmp.eq.f32.partialorder %v1104, %v1118
      %vm1137 = vcmp.eq.f32.partialorder %v1105, %v1121
      %vm1138 = vcmp.eq.f32.partialorder %v1106, %v1124
      %vm1139 = vcmp.eq.f32.partialorder %v1107, %v1127
      %vm1140 = vcmp.eq.f32.partialorder %v1108, %v1130
      %vm1141 = vcmp.eq.f32.partialorder %v1109, %v1133
      %v1142 = vsel %vm1134, %v405, 64
      %v1143 = vsel %vm1135, %v405, 64
      %v1144 = vsel %vm1136, %v405, 64
      %v1145 = vsel %vm1137, %v405, 64
      %v1146 = vsel %vm1138, %v405, 64
      %v1147 = vsel %vm1139, %v405, 64
      %v1148 = vsel %vm1140, %v405, 64
      %v1149 = vsel %vm1141, %v405, 64
      %v1150 = vsel %vm372, %v1142, 2147483647
      %v1151 = vand.u32 %v1150, 65535
      %v1152 = vshra.s32 %v1150, 16
      %v1153 = vcvt.s32.f32 %v1151
      %v1154 = vcvt.s32.f32 %v1152
      %1155 = vmin.xlane.f32.xlu0 %v1154
      %v1156 = vpop.xlane.xlu0 %1155
      %vm1157 = vcmp.eq.f32.partialorder %v1154, %v1156
      %v1158 = vsel %vm1157, %v1153, inf
      %1159 = vmin.xlane.f32.xlu0 %v1158
      %v1160 = vpop.xlane.xlu0 %1159
      %v1161 = vcvt.f32.s32 %v1160
      %v1162 = vcvt.f32.s32 %v1156
      %v1163 = vshll.u32 %v1162, 16
      %v1164 = vadd.s32 %v1163, %v1161
      %v1165 = vsel %vm372, %v1143, 2147483647
      %v1166 = vand.u32 %v1165, 65535
      %v1167 = vshra.s32 %v1165, 16
      %v1168 = vcvt.s32.f32 %v1166
      %v1169 = vcvt.s32.f32 %v1167
      %1170 = vmin.xlane.f32.xlu0 %v1169
      %v1171 = vpop.xlane.xlu0 %1170
      %vm1172 = vcmp.eq.f32.partialorder %v1169, %v1171
      %v1173 = vsel %vm1172, %v1168, inf
      %1174 = vmin.xlane.f32.xlu0 %v1173
      %v1175 = vpop.xlane.xlu0 %1174
      %v1176 = vcvt.f32.s32 %v1175
      %v1177 = vcvt.f32.s32 %v1171
      %v1178 = vshll.u32 %v1177, 16
      %v1179 = vadd.s32 %v1178, %v1176
      %v1180 = vsel %vm372, %v1144, 2147483647
      %v1181 = vand.u32 %v1180, 65535
      %v1182 = vshra.s32 %v1180, 16
      %v1183 = vcvt.s32.f32 %v1181
      %v1184 = vcvt.s32.f32 %v1182
      %1185 = vmin.xlane.f32.xlu0 %v1184
      %v1186 = vpop.xlane.xlu0 %1185
      %vm1187 = vcmp.eq.f32.partialorder %v1184, %v1186
      %v1188 = vsel %vm1187, %v1183, inf
      %1189 = vmin.xlane.f32.xlu0 %v1188
      %v1190 = vpop.xlane.xlu0 %1189
      %v1191 = vcvt.f32.s32 %v1190
      %v1192 = vcvt.f32.s32 %v1186
      %v1193 = vshll.u32 %v1192, 16
      %v1194 = vadd.s32 %v1193, %v1191
      %v1195 = vsel %vm372, %v1145, 2147483647
      %v1196 = vand.u32 %v1195, 65535
      %v1197 = vshra.s32 %v1195, 16
      %v1198 = vcvt.s32.f32 %v1196
      %v1199 = vcvt.s32.f32 %v1197
      %1200 = vmin.xlane.f32.xlu0 %v1199
      %v1201 = vpop.xlane.xlu0 %1200
      %vm1202 = vcmp.eq.f32.partialorder %v1199, %v1201
      %v1203 = vsel %vm1202, %v1198, inf
      %1204 = vmin.xlane.f32.xlu0 %v1203
      %v1205 = vpop.xlane.xlu0 %1204
      %v1206 = vcvt.f32.s32 %v1205
      %v1207 = vcvt.f32.s32 %v1201
      %v1208 = vshll.u32 %v1207, 16
      %v1209 = vadd.s32 %v1208, %v1206
      %v1210 = vsel %vm372, %v1146, 2147483647
      %v1211 = vand.u32 %v1210, 65535
      %v1212 = vshra.s32 %v1210, 16
      %v1213 = vcvt.s32.f32 %v1211
      %v1214 = vcvt.s32.f32 %v1212
      %1215 = vmin.xlane.f32.xlu0 %v1214
      %v1216 = vpop.xlane.xlu0 %1215
      %vm1217 = vcmp.eq.f32.partialorder %v1214, %v1216
      %v1218 = vsel %vm1217, %v1213, inf
      %1219 = vmin.xlane.f32.xlu0 %v1218
      %v1220 = vpop.xlane.xlu0 %1219
      %v1221 = vcvt.f32.s32 %v1220
      %v1222 = vcvt.f32.s32 %v1216
      %v1223 = vshll.u32 %v1222, 16
      %v1224 = vadd.s32 %v1223, %v1221
      %v1225 = vsel %vm372, %v1147, 2147483647
      %v1226 = vand.u32 %v1225, 65535
      %v1227 = vshra.s32 %v1225, 16
      %v1228 = vcvt.s32.f32 %v1226
      %v1229 = vcvt.s32.f32 %v1227
      %1230 = vmin.xlane.f32.xlu0 %v1229
      %v1231 = vpop.xlane.xlu0 %1230
      %vm1232 = vcmp.eq.f32.partialorder %v1229, %v1231
      %v1233 = vsel %vm1232, %v1228, inf
      %1234 = vmin.xlane.f32.xlu0 %v1233
      %v1235 = vpop.xlane.xlu0 %1234
      %v1236 = vcvt.f32.s32 %v1235
      %v1237 = vcvt.f32.s32 %v1231
      %v1238 = vshll.u32 %v1237, 16
      %v1239 = vadd.s32 %v1238, %v1236
      %v1240 = vsel %vm372, %v1148, 2147483647
      %v1241 = vand.u32 %v1240, 65535
      %v1242 = vshra.s32 %v1240, 16
      %v1243 = vcvt.s32.f32 %v1241
      %v1244 = vcvt.s32.f32 %v1242
      %1245 = vmin.xlane.f32.xlu0 %v1244
      %v1246 = vpop.xlane.xlu0 %1245
      %vm1247 = vcmp.eq.f32.partialorder %v1244, %v1246
      %v1248 = vsel %vm1247, %v1243, inf
      %1249 = vmin.xlane.f32.xlu0 %v1248
      %v1250 = vpop.xlane.xlu0 %1249
      %v1251 = vcvt.f32.s32 %v1250
      %v1252 = vcvt.f32.s32 %v1246
      %v1253 = vshll.u32 %v1252, 16
      %v1254 = vadd.s32 %v1253, %v1251
      %v1255 = vsel %vm372, %v1149, 2147483647
      %v1256 = vand.u32 %v1255, 65535
      %v1257 = vshra.s32 %v1255, 16
      %v1258 = vcvt.s32.f32 %v1256
      %v1259 = vcvt.s32.f32 %v1257
      %1260 = vmin.xlane.f32.xlu0 %v1259
      %v1261 = vpop.xlane.xlu0 %1260
      %vm1262 = vcmp.eq.f32.partialorder %v1259, %v1261
      %v1263 = vsel %vm1262, %v1258, inf
      %1264 = vmin.xlane.f32.xlu0 %v1263
      %v1265 = vpop.xlane.xlu0 %1264
      %v1266 = vcvt.f32.s32 %v1265
      %v1267 = vcvt.f32.s32 %v1261
      %v1268 = vshll.u32 %v1267, 16
      %v1269 = vadd.s32 %v1268, %v1266
      %vm1270 = vcmp.eq.s32.totalorder %v405, %v1164
      %vm1271 = vcmp.eq.s32.totalorder %v405, %v1179
      %vm1272 = vcmp.eq.s32.totalorder %v405, %v1194
      %vm1273 = vcmp.eq.s32.totalorder %v405, %v1209
      %vm1274 = vcmp.eq.s32.totalorder %v405, %v1224
      %vm1275 = vcmp.eq.s32.totalorder %v405, %v1239
      %vm1276 = vcmp.eq.s32.totalorder %v405, %v1254
      %vm1277 = vcmp.eq.s32.totalorder %v405, %v1269
      %v1278 = vsel %vm1270, -inf, %v1102
      %v1279 = vsel %vm1271, -inf, %v1103
      %v1280 = vsel %vm1272, -inf, %v1104
      %v1281 = vsel %vm1273, -inf, %v1105
      %v1282 = vsel %vm1274, -inf, %v1106
      %v1283 = vsel %vm1275, -inf, %v1107
      %v1284 = vsel %vm1276, -inf, %v1108
      %v1285 = vsel %vm1277, -inf, %v1109
      %v1286 = vsel %vm372, %v1278, -inf
      %1287 = vmax.xlane.f32.xlu0 %v1286
      %v1288 = vpop.xlane.xlu0 %1287
      %v1289 = vsel %vm372, %v1279, -inf
      %1290 = vmax.xlane.f32.xlu0 %v1289
      %v1291 = vpop.xlane.xlu0 %1290
      %v1292 = vsel %vm372, %v1280, -inf
      %1293 = vmax.xlane.f32.xlu0 %v1292
      %v1294 = vpop.xlane.xlu0 %1293
      %v1295 = vsel %vm372, %v1281, -inf
      %1296 = vmax.xlane.f32.xlu0 %v1295
      %v1297 = vpop.xlane.xlu0 %1296
      %v1298 = vsel %vm372, %v1282, -inf
      %1299 = vmax.xlane.f32.xlu0 %v1298
      %v1300 = vpop.xlane.xlu0 %1299
      %v1301 = vsel %vm372, %v1283, -inf
      %1302 = vmax.xlane.f32.xlu0 %v1301
      %v1303 = vpop.xlane.xlu0 %1302
      %v1304 = vsel %vm372, %v1284, -inf
      %1305 = vmax.xlane.f32.xlu0 %v1304
      %v1306 = vpop.xlane.xlu0 %1305
      %v1307 = vsel %vm372, %v1285, -inf
      %1308 = vmax.xlane.f32.xlu0 %v1307
      %v1309 = vpop.xlane.xlu0 %1308
      %vm1310 = vcmp.eq.f32.partialorder %v1278, %v1288
      %vm1311 = vcmp.eq.f32.partialorder %v1279, %v1291
      %vm1312 = vcmp.eq.f32.partialorder %v1280, %v1294
      %vm1313 = vcmp.eq.f32.partialorder %v1281, %v1297
      %vm1314 = vcmp.eq.f32.partialorder %v1282, %v1300
      %vm1315 = vcmp.eq.f32.partialorder %v1283, %v1303
      %vm1316 = vcmp.eq.f32.partialorder %v1284, %v1306
      %vm1317 = vcmp.eq.f32.partialorder %v1285, %v1309
      %v1318 = vsel %vm1310, %v405, 64
      %v1319 = vsel %vm1311, %v405, 64
      %v1320 = vsel %vm1312, %v405, 64
      %v1321 = vsel %vm1313, %v405, 64
      %v1322 = vsel %vm1314, %v405, 64
      %v1323 = vsel %vm1315, %v405, 64
      %v1324 = vsel %vm1316, %v405, 64
      %v1325 = vsel %vm1317, %v405, 64
      %v1326 = vsel %vm372, %v1318, 2147483647
      %v1327 = vand.u32 %v1326, 65535
      %v1328 = vshra.s32 %v1326, 16
      %v1329 = vcvt.s32.f32 %v1327
      %v1330 = vcvt.s32.f32 %v1328
      %1331 = vmin.xlane.f32.xlu0 %v1330
      %v1332 = vpop.xlane.xlu0 %1331
      %vm1333 = vcmp.eq.f32.partialorder %v1330, %v1332
      %v1334 = vsel %vm1333, %v1329, inf
      %1335 = vmin.xlane.f32.xlu0 %v1334
      %v1336 = vpop.xlane.xlu0 %1335
      %v1337 = vcvt.f32.s32 %v1336
      %v1338 = vcvt.f32.s32 %v1332
      %v1339 = vshll.u32 %v1338, 16
      %v1340 = vadd.s32 %v1339, %v1337
      %v1341 = vsel %vm372, %v1319, 2147483647
      %v1342 = vand.u32 %v1341, 65535
      %v1343 = vshra.s32 %v1341, 16
      %v1344 = vcvt.s32.f32 %v1342
      %v1345 = vcvt.s32.f32 %v1343
      %1346 = vmin.xlane.f32.xlu0 %v1345
      %v1347 = vpop.xlane.xlu0 %1346
      %vm1348 = vcmp.eq.f32.partialorder %v1345, %v1347
      %v1349 = vsel %vm1348, %v1344, inf
      %1350 = vmin.xlane.f32.xlu0 %v1349
      %v1351 = vpop.xlane.xlu0 %1350
      %v1352 = vcvt.f32.s32 %v1351
      %v1353 = vcvt.f32.s32 %v1347
      %v1354 = vshll.u32 %v1353, 16
      %v1355 = vadd.s32 %v1354, %v1352
      %v1356 = vsel %vm372, %v1320, 2147483647
      %v1357 = vand.u32 %v1356, 65535
      %v1358 = vshra.s32 %v1356, 16
      %v1359 = vcvt.s32.f32 %v1357
      %v1360 = vcvt.s32.f32 %v1358
      %1361 = vmin.xlane.f32.xlu0 %v1360
      %v1362 = vpop.xlane.xlu0 %1361
      %vm1363 = vcmp.eq.f32.partialorder %v1360, %v1362
      %v1364 = vsel %vm1363, %v1359, inf
      %1365 = vmin.xlane.f32.xlu0 %v1364
      %v1366 = vpop.xlane.xlu0 %1365
      %v1367 = vcvt.f32.s32 %v1366
      %v1368 = vcvt.f32.s32 %v1362
      %v1369 = vshll.u32 %v1368, 16
      %v1370 = vadd.s32 %v1369, %v1367
      %v1371 = vsel %vm372, %v1321, 2147483647
      %v1372 = vand.u32 %v1371, 65535
      %v1373 = vshra.s32 %v1371, 16
      %v1374 = vcvt.s32.f32 %v1372
      %v1375 = vcvt.s32.f32 %v1373
      %1376 = vmin.xlane.f32.xlu0 %v1375
      %v1377 = vpop.xlane.xlu0 %1376
      %vm1378 = vcmp.eq.f32.partialorder %v1375, %v1377
      %v1379 = vsel %vm1378, %v1374, inf
      %1380 = vmin.xlane.f32.xlu0 %v1379
      %v1381 = vpop.xlane.xlu0 %1380
      %v1382 = vcvt.f32.s32 %v1381
      %v1383 = vcvt.f32.s32 %v1377
      %v1384 = vshll.u32 %v1383, 16
      %v1385 = vadd.s32 %v1384, %v1382
      %v1386 = vsel %vm372, %v1322, 2147483647
      %v1387 = vand.u32 %v1386, 65535
      %v1388 = vshra.s32 %v1386, 16
      %v1389 = vcvt.s32.f32 %v1387
      %v1390 = vcvt.s32.f32 %v1388
      %1391 = vmin.xlane.f32.xlu0 %v1390
      %v1392 = vpop.xlane.xlu0 %1391
      %vm1393 = vcmp.eq.f32.partialorder %v1390, %v1392
      %v1394 = vsel %vm1393, %v1389, inf
      %1395 = vmin.xlane.f32.xlu0 %v1394
      %v1396 = vpop.xlane.xlu0 %1395
      %v1397 = vcvt.f32.s32 %v1396
      %v1398 = vcvt.f32.s32 %v1392
      %v1399 = vshll.u32 %v1398, 16
      %v1400 = vadd.s32 %v1399, %v1397
      %v1401 = vsel %vm372, %v1323, 2147483647
      %v1402 = vand.u32 %v1401, 65535
      %v1403 = vshra.s32 %v1401, 16
      %v1404 = vcvt.s32.f32 %v1402
      %v1405 = vcvt.s32.f32 %v1403
      %1406 = vmin.xlane.f32.xlu0 %v1405
      %v1407 = vpop.xlane.xlu0 %1406
      %vm1408 = vcmp.eq.f32.partialorder %v1405, %v1407
      %v1409 = vsel %vm1408, %v1404, inf
      %1410 = vmin.xlane.f32.xlu0 %v1409
      %v1411 = vpop.xlane.xlu0 %1410
      %v1412 = vcvt.f32.s32 %v1411
      %v1413 = vcvt.f32.s32 %v1407
      %v1414 = vshll.u32 %v1413, 16
      %v1415 = vadd.s32 %v1414, %v1412
      %v1416 = vsel %vm372, %v1324, 2147483647
      %v1417 = vand.u32 %v1416, 65535
      %v1418 = vshra.s32 %v1416, 16
      %v1419 = vcvt.s32.f32 %v1417
      %v1420 = vcvt.s32.f32 %v1418
      %1421 = vmin.xlane.f32.xlu0 %v1420
      %v1422 = vpop.xlane.xlu0 %1421
      %vm1423 = vcmp.eq.f32.partialorder %v1420, %v1422
      %v1424 = vsel %vm1423, %v1419, inf
      %1425 = vmin.xlane.f32.xlu0 %v1424
      %v1426 = vpop.xlane.xlu0 %1425
      %v1427 = vcvt.f32.s32 %v1426
      %v1428 = vcvt.f32.s32 %v1422
      %v1429 = vshll.u32 %v1428, 16
      %v1430 = vadd.s32 %v1429, %v1427
      %v1431 = vsel %vm372, %v1325, 2147483647
      %v1432 = vand.u32 %v1431, 65535
      %v1433 = vshra.s32 %v1431, 16
      %v1434 = vcvt.s32.f32 %v1432
      %v1435 = vcvt.s32.f32 %v1433
      %1436 = vmin.xlane.f32.xlu0 %v1435
      %v1437 = vpop.xlane.xlu0 %1436
      %vm1438 = vcmp.eq.f32.partialorder %v1435, %v1437
      %v1439 = vsel %vm1438, %v1434, inf
      %1440 = vmin.xlane.f32.xlu0 %v1439
      %v1441 = vpop.xlane.xlu0 %1440
      %v1442 = vcvt.f32.s32 %v1441
      %v1443 = vcvt.f32.s32 %v1437
      %v1444 = vshll.u32 %v1443, 16
      %v1445 = vadd.s32 %v1444, %v1442
      %vm1446 = vcmp.eq.s32.totalorder %v405, %v1340
      %vm1447 = vcmp.eq.s32.totalorder %v405, %v1355
      %vm1448 = vcmp.eq.s32.totalorder %v405, %v1370
      %vm1449 = vcmp.eq.s32.totalorder %v405, %v1385
      %vm1450 = vcmp.eq.s32.totalorder %v405, %v1400
      %vm1451 = vcmp.eq.s32.totalorder %v405, %v1415
      %vm1452 = vcmp.eq.s32.totalorder %v405, %v1430
      %vm1453 = vcmp.eq.s32.totalorder %v405, %v1445
      %v1454 = vsel %vm1446, -inf, %v1278
      %v1455 = vsel %vm1447, -inf, %v1279
      %v1456 = vsel %vm1448, -inf, %v1280
      %v1457 = vsel %vm1449, -inf, %v1281
      %v1458 = vsel %vm1450, -inf, %v1282
      %v1459 = vsel %vm1451, -inf, %v1283
      %v1460 = vsel %vm1452, -inf, %v1284
      %v1461 = vsel %vm1453, -inf, %v1285
      %v1462 = vsel %vm372, %v1454, -inf
      %1463 = vmax.xlane.f32.xlu0 %v1462
      %v1464 = vpop.xlane.xlu0 %1463
      %v1465 = vsel %vm372, %v1455, -inf
      %1466 = vmax.xlane.f32.xlu0 %v1465
      %v1467 = vpop.xlane.xlu0 %1466
      %v1468 = vsel %vm372, %v1456, -inf
      %1469 = vmax.xlane.f32.xlu0 %v1468
      %v1470 = vpop.xlane.xlu0 %1469
      %v1471 = vsel %vm372, %v1457, -inf
      %1472 = vmax.xlane.f32.xlu0 %v1471
      %v1473 = vpop.xlane.xlu0 %1472
      %v1474 = vsel %vm372, %v1458, -inf
      %1475 = vmax.xlane.f32.xlu0 %v1474
      %v1476 = vpop.xlane.xlu0 %1475
      %v1477 = vsel %vm372, %v1459, -inf
      %1478 = vmax.xlane.f32.xlu0 %v1477
      %v1479 = vpop.xlane.xlu0 %1478
      %v1480 = vsel %vm372, %v1460, -inf
      %1481 = vmax.xlane.f32.xlu0 %v1480
      %v1482 = vpop.xlane.xlu0 %1481
      %v1483 = vsel %vm372, %v1461, -inf
      %1484 = vmax.xlane.f32.xlu0 %v1483
      %v1485 = vpop.xlane.xlu0 %1484
      %vm1486 = vcmp.eq.f32.partialorder %v1454, %v1464
      %vm1487 = vcmp.eq.f32.partialorder %v1455, %v1467
      %vm1488 = vcmp.eq.f32.partialorder %v1456, %v1470
      %vm1489 = vcmp.eq.f32.partialorder %v1457, %v1473
      %vm1490 = vcmp.eq.f32.partialorder %v1458, %v1476
      %vm1491 = vcmp.eq.f32.partialorder %v1459, %v1479
      %vm1492 = vcmp.eq.f32.partialorder %v1460, %v1482
      %vm1493 = vcmp.eq.f32.partialorder %v1461, %v1485
      %v1494 = vsel %vm1486, %v405, 64
      %v1495 = vsel %vm1487, %v405, 64
      %v1496 = vsel %vm1488, %v405, 64
      %v1497 = vsel %vm1489, %v405, 64
      %v1498 = vsel %vm1490, %v405, 64
      %v1499 = vsel %vm1491, %v405, 64
      %v1500 = vsel %vm1492, %v405, 64
      %v1501 = vsel %vm1493, %v405, 64
      %v1502 = vsel %vm372, %v1494, 2147483647
      %v1503 = vand.u32 %v1502, 65535
      %v1504 = vshra.s32 %v1502, 16
      %v1505 = vcvt.s32.f32 %v1503
      %v1506 = vcvt.s32.f32 %v1504
      %1507 = vmin.xlane.f32.xlu0 %v1506
      %v1508 = vpop.xlane.xlu0 %1507
      %vm1509 = vcmp.eq.f32.partialorder %v1506, %v1508
      %v1510 = vsel %vm1509, %v1505, inf
      %1511 = vmin.xlane.f32.xlu0 %v1510
      %v1512 = vpop.xlane.xlu0 %1511
      %v1513 = vcvt.f32.s32 %v1512
      %v1514 = vcvt.f32.s32 %v1508
      %v1515 = vshll.u32 %v1514, 16
      %v1516 = vadd.s32 %v1515, %v1513
      %v1517 = vsel %vm372, %v1495, 2147483647
      %v1518 = vand.u32 %v1517, 65535
      %v1519 = vshra.s32 %v1517, 16
      %v1520 = vcvt.s32.f32 %v1518
      %v1521 = vcvt.s32.f32 %v1519
      %1522 = vmin.xlane.f32.xlu0 %v1521
      %v1523 = vpop.xlane.xlu0 %1522
      %vm1524 = vcmp.eq.f32.partialorder %v1521, %v1523
      %v1525 = vsel %vm1524, %v1520, inf
      %1526 = vmin.xlane.f32.xlu0 %v1525
      %v1527 = vpop.xlane.xlu0 %1526
      %v1528 = vcvt.f32.s32 %v1527
      %v1529 = vcvt.f32.s32 %v1523
      %v1530 = vshll.u32 %v1529, 16
      %v1531 = vadd.s32 %v1530, %v1528
      %v1532 = vsel %vm372, %v1496, 2147483647
      %v1533 = vand.u32 %v1532, 65535
      %v1534 = vshra.s32 %v1532, 16
      %v1535 = vcvt.s32.f32 %v1533
      %v1536 = vcvt.s32.f32 %v1534
      %1537 = vmin.xlane.f32.xlu0 %v1536
      %v1538 = vpop.xlane.xlu0 %1537
      %vm1539 = vcmp.eq.f32.partialorder %v1536, %v1538
      %v1540 = vsel %vm1539, %v1535, inf
      %1541 = vmin.xlane.f32.xlu0 %v1540
      %v1542 = vpop.xlane.xlu0 %1541
      %v1543 = vcvt.f32.s32 %v1542
      %v1544 = vcvt.f32.s32 %v1538
      %v1545 = vshll.u32 %v1544, 16
      %v1546 = vadd.s32 %v1545, %v1543
      %v1547 = vsel %vm372, %v1497, 2147483647
      %v1548 = vand.u32 %v1547, 65535
      %v1549 = vshra.s32 %v1547, 16
      %v1550 = vcvt.s32.f32 %v1548
      %v1551 = vcvt.s32.f32 %v1549
      %1552 = vmin.xlane.f32.xlu0 %v1551
      %v1553 = vpop.xlane.xlu0 %1552
      %vm1554 = vcmp.eq.f32.partialorder %v1551, %v1553
      %v1555 = vsel %vm1554, %v1550, inf
      %1556 = vmin.xlane.f32.xlu0 %v1555
      %v1557 = vpop.xlane.xlu0 %1556
      %v1558 = vcvt.f32.s32 %v1557
      %v1559 = vcvt.f32.s32 %v1553
      %v1560 = vshll.u32 %v1559, 16
      %v1561 = vadd.s32 %v1560, %v1558
      %v1562 = vsel %vm372, %v1498, 2147483647
      %v1563 = vand.u32 %v1562, 65535
      %v1564 = vshra.s32 %v1562, 16
      %v1565 = vcvt.s32.f32 %v1563
      %v1566 = vcvt.s32.f32 %v1564
      %1567 = vmin.xlane.f32.xlu0 %v1566
      %v1568 = vpop.xlane.xlu0 %1567
      %vm1569 = vcmp.eq.f32.partialorder %v1566, %v1568
      %v1570 = vsel %vm1569, %v1565, inf
      %1571 = vmin.xlane.f32.xlu0 %v1570
      %v1572 = vpop.xlane.xlu0 %1571
      %v1573 = vcvt.f32.s32 %v1572
      %v1574 = vcvt.f32.s32 %v1568
      %v1575 = vshll.u32 %v1574, 16
      %v1576 = vadd.s32 %v1575, %v1573
      %v1577 = vsel %vm372, %v1499, 2147483647
      %v1578 = vand.u32 %v1577, 65535
      %v1579 = vshra.s32 %v1577, 16
      %v1580 = vcvt.s32.f32 %v1578
      %v1581 = vcvt.s32.f32 %v1579
      %1582 = vmin.xlane.f32.xlu0 %v1581
      %v1583 = vpop.xlane.xlu0 %1582
      %vm1584 = vcmp.eq.f32.partialorder %v1581, %v1583
      %v1585 = vsel %vm1584, %v1580, inf
      %1586 = vmin.xlane.f32.xlu0 %v1585
      %v1587 = vpop.xlane.xlu0 %1586
      %v1588 = vcvt.f32.s32 %v1587
      %v1589 = vcvt.f32.s32 %v1583
      %v1590 = vshll.u32 %v1589, 16
      %v1591 = vadd.s32 %v1590, %v1588
      %v1592 = vsel %vm372, %v1500, 2147483647
      %v1593 = vand.u32 %v1592, 65535
      %v1594 = vshra.s32 %v1592, 16
      %v1595 = vcvt.s32.f32 %v1593
      %v1596 = vcvt.s32.f32 %v1594
      %1597 = vmin.xlane.f32.xlu0 %v1596
      %v1598 = vpop.xlane.xlu0 %1597
      %vm1599 = vcmp.eq.f32.partialorder %v1596, %v1598
      %v1600 = vsel %vm1599, %v1595, inf
      %1601 = vmin.xlane.f32.xlu0 %v1600
      %v1602 = vpop.xlane.xlu0 %1601
      %v1603 = vcvt.f32.s32 %v1602
      %v1604 = vcvt.f32.s32 %v1598
      %v1605 = vshll.u32 %v1604, 16
      %v1606 = vadd.s32 %v1605, %v1603
      %v1607 = vsel %vm372, %v1501, 2147483647
      %v1608 = vand.u32 %v1607, 65535
      %v1609 = vshra.s32 %v1607, 16
      %v1610 = vcvt.s32.f32 %v1608
      %v1611 = vcvt.s32.f32 %v1609
      %1612 = vmin.xlane.f32.xlu0 %v1611
      %v1613 = vpop.xlane.xlu0 %1612
      %vm1614 = vcmp.eq.f32.partialorder %v1611, %v1613
      %v1615 = vsel %vm1614, %v1610, inf
      %1616 = vmin.xlane.f32.xlu0 %v1615
      %v1617 = vpop.xlane.xlu0 %1616
      %v1618 = vcvt.f32.s32 %v1617
      %v1619 = vcvt.f32.s32 %v1613
      %v1620 = vshll.u32 %v1619, 16
      %v1621 = vadd.s32 %v1620, %v1618
      %vm1622 = vcmp.eq.s32.totalorder %v405, %v1516
      %vm1623 = vcmp.eq.s32.totalorder %v405, %v1531
      %vm1624 = vcmp.eq.s32.totalorder %v405, %v1546
      %vm1625 = vcmp.eq.s32.totalorder %v405, %v1561
      %vm1626 = vcmp.eq.s32.totalorder %v405, %v1576
      %vm1627 = vcmp.eq.s32.totalorder %v405, %v1591
      %vm1628 = vcmp.eq.s32.totalorder %v405, %v1606
      %vm1629 = vcmp.eq.s32.totalorder %v405, %v1621
      %v1630 = vsel %vm1622, -inf, %v1454
      %v1631 = vsel %vm1623, -inf, %v1455
      %v1632 = vsel %vm1624, -inf, %v1456
      %v1633 = vsel %vm1625, -inf, %v1457
      %v1634 = vsel %vm1626, -inf, %v1458
      %v1635 = vsel %vm1627, -inf, %v1459
      %v1636 = vsel %vm1628, -inf, %v1460
      %v1637 = vsel %vm1629, -inf, %v1461
      %v1638 = vsel %vm372, %v1630, -inf
      %1639 = vmax.xlane.f32.xlu0 %v1638
      %v1640 = vpop.xlane.xlu0 %1639
      %v1641 = vsel %vm372, %v1631, -inf
      %1642 = vmax.xlane.f32.xlu0 %v1641
      %v1643 = vpop.xlane.xlu0 %1642
      %v1644 = vsel %vm372, %v1632, -inf
      %1645 = vmax.xlane.f32.xlu0 %v1644
      %v1646 = vpop.xlane.xlu0 %1645
      %v1647 = vsel %vm372, %v1633, -inf
      %1648 = vmax.xlane.f32.xlu0 %v1647
      %v1649 = vpop.xlane.xlu0 %1648
      %v1650 = vsel %vm372, %v1634, -inf
      %1651 = vmax.xlane.f32.xlu0 %v1650
      %v1652 = vpop.xlane.xlu0 %1651
      %v1653 = vsel %vm372, %v1635, -inf
      %1654 = vmax.xlane.f32.xlu0 %v1653
      %v1655 = vpop.xlane.xlu0 %1654
      %v1656 = vsel %vm372, %v1636, -inf
      %1657 = vmax.xlane.f32.xlu0 %v1656
      %v1658 = vpop.xlane.xlu0 %1657
      %v1659 = vsel %vm372, %v1637, -inf
      %1660 = vmax.xlane.f32.xlu0 %v1659
      %v1661 = vpop.xlane.xlu0 %1660
      %vm1662 = vcmp.eq.f32.partialorder %v1630, %v1640
      %vm1663 = vcmp.eq.f32.partialorder %v1631, %v1643
      %vm1664 = vcmp.eq.f32.partialorder %v1632, %v1646
      %vm1665 = vcmp.eq.f32.partialorder %v1633, %v1649
      %vm1666 = vcmp.eq.f32.partialorder %v1634, %v1652
      %vm1667 = vcmp.eq.f32.partialorder %v1635, %v1655
      %vm1668 = vcmp.eq.f32.partialorder %v1636, %v1658
      %vm1669 = vcmp.eq.f32.partialorder %v1637, %v1661
      %v1670 = vsel %vm1662, %v405, 64
      %v1671 = vsel %vm1663, %v405, 64
      %v1672 = vsel %vm1664, %v405, 64
      %v1673 = vsel %vm1665, %v405, 64
      %v1674 = vsel %vm1666, %v405, 64
      %v1675 = vsel %vm1667, %v405, 64
      %v1676 = vsel %vm1668, %v405, 64
      %v1677 = vsel %vm1669, %v405, 64
      %v1678 = vsel %vm372, %v1670, 2147483647
      %v1679 = vand.u32 %v1678, 65535
      %v1680 = vshra.s32 %v1678, 16
      %v1681 = vcvt.s32.f32 %v1679
      %v1682 = vcvt.s32.f32 %v1680
      %1683 = vmin.xlane.f32.xlu0 %v1682
      %v1684 = vpop.xlane.xlu0 %1683
      %vm1685 = vcmp.eq.f32.partialorder %v1682, %v1684
      %v1686 = vsel %vm1685, %v1681, inf
      %1687 = vmin.xlane.f32.xlu0 %v1686
      %v1688 = vpop.xlane.xlu0 %1687
      %v1689 = vcvt.f32.s32 %v1688
      %v1690 = vcvt.f32.s32 %v1684
      %v1691 = vshll.u32 %v1690, 16
      %v1692 = vadd.s32 %v1691, %v1689
      %v1693 = vsel %vm372, %v1671, 2147483647
      %v1694 = vand.u32 %v1693, 65535
      %v1695 = vshra.s32 %v1693, 16
      %v1696 = vcvt.s32.f32 %v1694
      %v1697 = vcvt.s32.f32 %v1695
      %1698 = vmin.xlane.f32.xlu0 %v1697
      %v1699 = vpop.xlane.xlu0 %1698
      %vm1700 = vcmp.eq.f32.partialorder %v1697, %v1699
      %v1701 = vsel %vm1700, %v1696, inf
      %1702 = vmin.xlane.f32.xlu0 %v1701
      %v1703 = vpop.xlane.xlu0 %1702
      %v1704 = vcvt.f32.s32 %v1703
      %v1705 = vcvt.f32.s32 %v1699
      %v1706 = vshll.u32 %v1705, 16
      %v1707 = vadd.s32 %v1706, %v1704
      %v1708 = vsel %vm372, %v1672, 2147483647
      %v1709 = vand.u32 %v1708, 65535
      %v1710 = vshra.s32 %v1708, 16
      %v1711 = vcvt.s32.f32 %v1709
      %v1712 = vcvt.s32.f32 %v1710
      %1713 = vmin.xlane.f32.xlu0 %v1712
      %v1714 = vpop.xlane.xlu0 %1713
      %vm1715 = vcmp.eq.f32.partialorder %v1712, %v1714
      %v1716 = vsel %vm1715, %v1711, inf
      %1717 = vmin.xlane.f32.xlu0 %v1716
      %v1718 = vpop.xlane.xlu0 %1717
      %v1719 = vcvt.f32.s32 %v1718
      %v1720 = vcvt.f32.s32 %v1714
      %v1721 = vshll.u32 %v1720, 16
      %v1722 = vadd.s32 %v1721, %v1719
      %v1723 = vsel %vm372, %v1673, 2147483647
      %v1724 = vand.u32 %v1723, 65535
      %v1725 = vshra.s32 %v1723, 16
      %v1726 = vcvt.s32.f32 %v1724
      %v1727 = vcvt.s32.f32 %v1725
      %1728 = vmin.xlane.f32.xlu0 %v1727
      %v1729 = vpop.xlane.xlu0 %1728
      %vm1730 = vcmp.eq.f32.partialorder %v1727, %v1729
      %v1731 = vsel %vm1730, %v1726, inf
      %1732 = vmin.xlane.f32.xlu0 %v1731
      %v1733 = vpop.xlane.xlu0 %1732
      %v1734 = vcvt.f32.s32 %v1733
      %v1735 = vcvt.f32.s32 %v1729
      %v1736 = vshll.u32 %v1735, 16
      %v1737 = vadd.s32 %v1736, %v1734
      %v1738 = vsel %vm372, %v1674, 2147483647
      %v1739 = vand.u32 %v1738, 65535
      %v1740 = vshra.s32 %v1738, 16
      %v1741 = vcvt.s32.f32 %v1739
      %v1742 = vcvt.s32.f32 %v1740
      %1743 = vmin.xlane.f32.xlu0 %v1742
      %v1744 = vpop.xlane.xlu0 %1743
      %vm1745 = vcmp.eq.f32.partialorder %v1742, %v1744
      %v1746 = vsel %vm1745, %v1741, inf
      %1747 = vmin.xlane.f32.xlu0 %v1746
      %v1748 = vpop.xlane.xlu0 %1747
      %v1749 = vcvt.f32.s32 %v1748
      %v1750 = vcvt.f32.s32 %v1744
      %v1751 = vshll.u32 %v1750, 16
      %v1752 = vadd.s32 %v1751, %v1749
      %v1753 = vsel %vm372, %v1675, 2147483647
      %v1754 = vand.u32 %v1753, 65535
      %v1755 = vshra.s32 %v1753, 16
      %v1756 = vcvt.s32.f32 %v1754
      %v1757 = vcvt.s32.f32 %v1755
      %1758 = vmin.xlane.f32.xlu0 %v1757
      %v1759 = vpop.xlane.xlu0 %1758
      %vm1760 = vcmp.eq.f32.partialorder %v1757, %v1759
      %v1761 = vsel %vm1760, %v1756, inf
      %1762 = vmin.xlane.f32.xlu0 %v1761
      %v1763 = vpop.xlane.xlu0 %1762
      %v1764 = vcvt.f32.s32 %v1763
      %v1765 = vcvt.f32.s32 %v1759
      %v1766 = vshll.u32 %v1765, 16
      %v1767 = vadd.s32 %v1766, %v1764
      %v1768 = vsel %vm372, %v1676, 2147483647
      %v1769 = vand.u32 %v1768, 65535
      %v1770 = vshra.s32 %v1768, 16
      %v1771 = vcvt.s32.f32 %v1769
      %v1772 = vcvt.s32.f32 %v1770
      %1773 = vmin.xlane.f32.xlu0 %v1772
      %v1774 = vpop.xlane.xlu0 %1773
      %vm1775 = vcmp.eq.f32.partialorder %v1772, %v1774
      %v1776 = vsel %vm1775, %v1771, inf
      %1777 = vmin.xlane.f32.xlu0 %v1776
      %v1778 = vpop.xlane.xlu0 %1777
      %v1779 = vcvt.f32.s32 %v1778
      %v1780 = vcvt.f32.s32 %v1774
      %v1781 = vshll.u32 %v1780, 16
      %v1782 = vadd.s32 %v1781, %v1779
      %v1783 = vsel %vm372, %v1677, 2147483647
      %v1784 = vand.u32 %v1783, 65535
      %v1785 = vshra.s32 %v1783, 16
      %v1786 = vcvt.s32.f32 %v1784
      %v1787 = vcvt.s32.f32 %v1785
      %1788 = vmin.xlane.f32.xlu0 %v1787
      %v1789 = vpop.xlane.xlu0 %1788
      %vm1790 = vcmp.eq.f32.partialorder %v1787, %v1789
      %v1791 = vsel %vm1790, %v1786, inf
      %1792 = vmin.xlane.f32.xlu0 %v1791
      %v1793 = vpop.xlane.xlu0 %1792
      %v1794 = vcvt.f32.s32 %v1793
      %v1795 = vcvt.f32.s32 %v1789
      %v1796 = vshll.u32 %v1795, 16
      %v1797 = vadd.s32 %v1796, %v1794
      %vm1798 = vcmask 7168
      %v1799 = vsel %vm1798, %v460, %v636
      %v1800 = vsel %vm1798, %v475, %v651
      %v1801 = vsel %vm1798, %v490, %v666
      %v1802 = vsel %vm1798, %v505, %v681
      %v1803 = vsel %vm1798, %v520, %v696
      %v1804 = vsel %vm1798, %v535, %v711
      %v1805 = vsel %vm1798, %v550, %v726
      %v1806 = vsel %vm1798, %v565, %v741
      %vm1807 = vcmask 15360
      %v1808 = vsel %vm1807, %v1799, %v812
      %v1809 = vsel %vm1807, %v1800, %v827
      %v1810 = vsel %vm1807, %v1801, %v842
      %v1811 = vsel %vm1807, %v1802, %v857
      %v1812 = vsel %vm1807, %v1803, %v872
      %v1813 = vsel %vm1807, %v1804, %v887
      %v1814 = vsel %vm1807, %v1805, %v902
      %v1815 = vsel %vm1807, %v1806, %v917
      %vm1816 = vcmask 23552
      %v1817 = vsel %vm1816, %v1808, %v988
      %v1818 = vsel %vm1816, %v1809, %v1003
      %v1819 = vsel %vm1816, %v1810, %v1018
      %v1820 = vsel %vm1816, %v1811, %v1033
      %v1821 = vsel %vm1816, %v1812, %v1048
      %v1822 = vsel %vm1816, %v1813, %v1063
      %v1823 = vsel %vm1816, %v1814, %v1078
      %v1824 = vsel %vm1816, %v1815, %v1093
      %vm1825 = vcmask 31744
      %v1826 = vsel %vm1825, %v1817, %v1164
      %v1827 = vsel %vm1825, %v1818, %v1179
      %v1828 = vsel %vm1825, %v1819, %v1194
      %v1829 = vsel %vm1825, %v1820, %v1209
      %v1830 = vsel %vm1825, %v1821, %v1224
      %v1831 = vsel %vm1825, %v1822, %v1239
      %v1832 = vsel %vm1825, %v1823, %v1254
      %v1833 = vsel %vm1825, %v1824, %v1269
      %vm1834 = vcmask 39936
      %v1835 = vsel %vm1834, %v1826, %v1340
      %v1836 = vsel %vm1834, %v1827, %v1355
      %v1837 = vsel %vm1834, %v1828, %v1370
      %v1838 = vsel %vm1834, %v1829, %v1385
      %v1839 = vsel %vm1834, %v1830, %v1400
      %v1840 = vsel %vm1834, %v1831, %v1415
      %v1841 = vsel %vm1834, %v1832, %v1430
      %v1842 = vsel %vm1834, %v1833, %v1445
      %vm1843 = vcmask 48128
      %v1844 = vsel %vm1843, %v1835, %v1516
      %v1845 = vsel %vm1843, %v1836, %v1531
      %v1846 = vsel %vm1843, %v1837, %v1546
      %v1847 = vsel %vm1843, %v1838, %v1561
      %v1848 = vsel %vm1843, %v1839, %v1576
      %v1849 = vsel %vm1843, %v1840, %v1591
      %v1850 = vsel %vm1843, %v1841, %v1606
      %v1851 = vsel %vm1843, %v1842, %v1621
      %vm1852 = vcmask 56320
      %v1853 = vsel %vm1852, %v1844, %v1692
      %v1854 = vsel %vm1852, %v1845, %v1707
      %v1855 = vsel %vm1852, %v1846, %v1722
      %v1856 = vsel %vm1852, %v1847, %v1737
      %v1857 = vsel %vm1852, %v1848, %v1752
      %v1858 = vsel %vm1852, %v1849, %v1767
      %v1859 = vsel %vm1852, %v1850, %v1782
      %v1860 = vsel %vm1852, %v1851, %v1797
      %1861 = vst.msk [vmem:[%s198] sm:$0xff] %vm209, %v1853
      %1862 = vst.msk [vmem:[%s198 + $0x8] sm:$0xff] %vm209, %v1854
      %1863 = vst.msk [vmem:[%s198 + $0x10] sm:$0xff] %vm209, %v1855
      %1864 = vst.msk [vmem:[%s198 + $0x18] sm:$0xff] %vm209, %v1856
      %1865 = vst.msk [vmem:[%s198 + $0x20] sm:$0xff] %vm209, %v1857
      %1866 = vst.msk [vmem:[%s198 + $0x28] sm:$0xff] %vm209, %v1858
      %1867 = vst.msk [vmem:[%s198 + $0x30] sm:$0xff] %vm209, %v1859
      %1868 = vst.msk [vmem:[%s198 + $0x38] sm:$0xff] %vm209, %v1860
      %s1869 = smul.u32 8, %s18
      %p1870 = scmp.lt.s32.totalorder %s17, 1
      %s1871 = scalar_select %p1870, %s17, 1
      %p1872 = scmp.lt.s32.totalorder %s1869, 7
      %s1873 = scalar_select %p1872, %s1869, 7
      %s1874 = smul.addr %s1871, 8
      %s1875 = sadd.s32 %s1873, %s1874
      %s1876 = smul.addr %s1875, 8
      %s1877 = scalar_lea.vmem %s2, %s1876
      // Predicated region
      $region29: #{tpu_custom_call.1} parent=27 // pred_check
        %p1878 = pneg %p99
      $region30: #{tpu_custom_call.1} parent=27 // pred_check_branch
        %1880 = sbr.rel (%p1878) target = $region32
      $region31: #{tpu_custom_call.1} parent=27 // pred_region
        %s1881 = smul.u32 8, %s18
      $region32: #{tpu_custom_call.1} parent=27 // pred_fallthru
        _
    $region28: #{tpu_custom_call.1} parent=5 // pred_fallthru
      _
    %p1882 = scmp.le.s32.totalorder 2, %s8
    // Predicated region
    $region33: #{tpu_custom_call.1} parent=5 // pred_check
      %p1883 = pneg %p1882
    $region34: #{tpu_custom_call.1} parent=5 // pred_check_branch
      %1885 = sbr.rel (%p1883) target = $region36
    $region35: #{tpu_custom_call.1} parent=5 // pred_region
      %s1886 = ssub.s32 %s8, 2
      // Predicated region
      $region37: #{tpu_custom_call.1} parent=35 // pred_check
        %p1887 = pneg %p105
      $region38: #{tpu_custom_call.1} parent=35 // pred_check_branch
        %1889 = sbr.rel (%p1887) target = $region40
      $region39: #{tpu_custom_call.1} parent=35 // pred_region
        %s1890 = smul.u32 8, %s20
        %p1891 = scmp.lt.s32.totalorder %s19, 1
        %s1892 = scalar_select %p1891, %s19, 1
        %p1893 = scmp.lt.s32.totalorder %s1890, 7
        %s1894 = scalar_select %p1893, %s1890, 7
        %s1895 = smul.addr %s1892, 8
        %s1896 = sadd.s32 %s1894, %s1895
        %s1897 = smul.addr %s1896, 8
        %s1898 = scalar_lea.vmem %s2, %s1897
      $region40: #{tpu_custom_call.1} parent=35 // pred_fallthru
        _
    $region36: #{tpu_custom_call.1} parent=5 // pred_fallthru
      _
  $region6: #{tpu_custom_call.1} parent=0 // loop_footer
    %s12 = sadd.s32 1, %s8
  $region7: #{tpu_custom_call.1} parent=0 // loop_footer_branch
    %7 = sbr.rel target = $region3
  $region8: #{tpu_custom_call.1} parent=0 // loop_exit
    _

</llo_original>
